<compile_context>
chip_gen: v7x
topology: tpu7x:2x2x1
jax: 0.10.0
libtpu: 0.0.40
codegen_flags: <defaults>
</compile_context>

<pallas_src>
import jax
import jax.numpy as jnp
from jax.experimental import pallas as pl
from jax.experimental.pallas import tpu as pltpu


def _round_up(n: int, m: int) -> int:
    return ((n + m - 1) // m) * m


def mlp_kernel(x_ref, w1_ref, b1_ref, w2_ref, b2_ref, o_ref):
    # fc1: [tb, in] @ [in, hidden_p] -> [tb, hidden_p], f32 accumulation on MXU.
    h = jnp.dot(x_ref[...], w1_ref[...], preferred_element_type=jnp.float32)
    h = jnp.maximum(h + b1_ref[...], 0.0)              # bias + ReLU in f32 (VPU)
    # fc2: [tb, hidden_p] @ [hidden_p, classes_p] -> [tb, classes_p].
    out = jnp.dot(h.astype(w2_ref.dtype), w2_ref[...],
                  preferred_element_type=jnp.float32)
    o_ref[...] = (out + b2_ref[...]).astype(o_ref.dtype)


def prepare_params(w1, b1, w2, b2, *, use_bf16=True):
    """One-time, offline parameter preparation (NOT in the per-call hot path).

    w1: [hidden, input]  (torch fc1.weight layout)   b1: [hidden]
    w2: [classes, hidden](torch fc2.weight layout)   b2: [classes]

    Pads the "out" dims to multiples of 128 (lane-dense MXU / unmasked vst),
    transposes the weights once into native [K, N] orientation, and optionally
    casts the matmul operands to bf16 (biases stay f32; accumulation is f32).
    Zero-padded hidden columns give relu(0 + 0) = 0 and hit zero w2 rows, so
    they contribute nothing; padded class columns are sliced off by the caller.
    """
    hidden_size, input_size = w1.shape
    num_classes = w2.shape[0]
    hidden_p = _round_up(hidden_size, 128)
    classes_p = _round_up(num_classes, 128)

    f32 = jnp.float32
    w1_t = jnp.pad(jnp.asarray(w1, f32).T,                       # [in, hidden_p]
                   ((0, 0), (0, hidden_p - hidden_size)))
    b1_p = jnp.pad(jnp.asarray(b1, f32),
                   (0, hidden_p - hidden_size)).reshape(1, hidden_p)
    w2_t = jnp.pad(jnp.asarray(w2, f32).T,                       # [hidden_p, classes_p]
                   ((0, hidden_p - hidden_size), (0, classes_p - num_classes)))
    b2_p = jnp.pad(jnp.asarray(b2, f32),
                   (0, classes_p - num_classes)).reshape(1, classes_p)

    wdtype = jnp.bfloat16 if use_bf16 else f32
    return {
        "w1": w1_t.astype(wdtype),
        "b1": b1_p,
        "w2": w2_t.astype(wdtype),
        "b2": b2_p,
        "input_size": input_size,
        "hidden_p": hidden_p,
        "classes_p": classes_p,
        "num_classes": num_classes,
    }


def neural_net_forward(x, params, *, tb=None):
    """Forward pass of NeuralNet (fc1 -> ReLU -> fc2) using prepared params.

    x: [B, input_size] float32 (cast to the matmul operand dtype per call).
    Returns [B, num_classes] float32.
    """
    B, input_size = x.shape
    assert input_size == params["input_size"]
    w1_p, b1_p, w2_p, b2_p = params["w1"], params["b1"], params["w2"], params["b2"]
    hidden_p, classes_p = params["hidden_p"], params["classes_p"]
    num_classes = params["num_classes"]
    op_dtype = w1_p.dtype

    # Batch tile: single grid step for small batches (single-TC chips have
    # nothing to pipeline against resident weights); clean 256/512 tiles for
    # large batches so padding stays small and M stays MXU-friendly.
    if tb is None:
        if B <= 512:
            tb = _round_up(B, 8)
        else:
            pad256 = _round_up(B, 256) - B
            pad512 = _round_up(B, 512) - B
            tb = 512 if pad512 <= pad256 else 256
    tb = max(8, (tb // 8) * 8)
    B_p = _round_up(B, tb)
    grid = (B_p // tb,)

    x_p = jnp.asarray(x, op_dtype)
    if B_p != B:
        # Only the small remainder is padded (<= 7 rows for B <= 512); the
        # extra output rows are sliced off below.
        x_p = jnp.pad(x_p, ((0, B_p - B), (0, 0)))

    itemsize = jnp.dtype(op_dtype).itemsize
    cost = pl.CostEstimate(
        flops=2 * B_p * (input_size * hidden_p + hidden_p * classes_p),
        transcendentals=0,
        bytes_accessed=(B_p * input_size * itemsize
                        + input_size * hidden_p * itemsize
                        + hidden_p * classes_p * itemsize
                        + (hidden_p + classes_p) * 4
                        + B_p * classes_p * 4),
    )

    out_p = pl.pallas_call(
        mlp_kernel,
        out_shape=jax.ShapeDtypeStruct((B_p, classes_p), jnp.float32),
        grid_spec=pltpu.PrefetchScalarGridSpec(
            num_scalar_prefetch=0,
            grid=grid,
            in_specs=[
                # streamed batch tile of the input (pipelined by Pallas)
                pl.BlockSpec((tb, input_size), lambda i: (i, 0)),
                # weights / biases: full-array blocks, constant across the grid
                pl.BlockSpec((input_size, hidden_p), lambda i: (0, 0)),
                pl.BlockSpec((1, hidden_p), lambda i: (0, 0)),
                pl.BlockSpec((hidden_p, classes_p), lambda i: (0, 0)),
                pl.BlockSpec((1, classes_p), lambda i: (0, 0)),
            ],
            out_specs=pl.BlockSpec((tb, classes_p), lambda i: (i, 0)),
        ),
        compiler_params=pltpu.CompilerParams(
            dimension_semantics=("parallel",)),
        cost_estimate=cost,
    )(x_p, w1_p, b1_p, w2_p, b2_p)

    # Strip batch / lane padding at the API boundary.
    return out_p[:B, :num_classes]


def _reference(x, w1, b1, w2, b2):
    h = x @ w1.T + b1
    h = jnp.maximum(h, 0.0)
    return h @ w2.T + b2


if __name__ == "__main__":
    # MNIST-FC-like shapes: NeuralNet(input_size, hidden_size, num_classes)
    batch = 64
    input_size = 784
    hidden_size = 500
    num_classes = 10

    key = jax.random.PRNGKey(0)
    kx, kw1, kb1, kw2, kb2 = jax.random.split(key, 5)

    x = jax.random.normal(kx, (batch, input_size), dtype=jnp.float32)

    # PyTorch nn.Linear default init: U(-1/sqrt(fan_in), 1/sqrt(fan_in))
    bound1 = 1.0 / (input_size ** 0.5)
    w1 = jax.random.uniform(kw1, (hidden_size, input_size), jnp.float32, -bound1, bound1)
    b1 = jax.random.uniform(kb1, (hidden_size,), jnp.float32, -bound1, bound1)
    bound2 = 1.0 / (hidden_size ** 0.5)
    w2 = jax.random.uniform(kw2, (num_classes, hidden_size), jnp.float32, -bound2, bound2)
    b2 = jax.random.uniform(kb2, (num_classes,), jnp.float32, -bound2, bound2)

    ref = _reference(x, w1, b1, w2, b2)

    # Strict check on the f32 path.
    params_f32 = prepare_params(w1, b1, w2, b2, use_bf16=False)
    out_f32 = jax.block_until_ready(neural_net_forward(x, params_f32))
    assert out_f32.shape == (batch, num_classes)
    assert jnp.allclose(out_f32, ref, atol=5e-4, rtol=5e-4), "f32 mismatch vs reference"

    # Default inference path: bf16 MXU operands, f32 accumulation.
    # (bf16 operands + bf16 hidden between layers -> looser tolerance expected.)
    params_bf16 = prepare_params(w1, b1, w2, b2)
    out_bf16 = jax.block_until_ready(neural_net_forward(x, params_bf16))
    assert out_bf16.shape == (batch, num_classes)
    assert jnp.allclose(out_bf16, ref, atol=5e-2, rtol=5e-2), "bf16 mismatch vs reference"

    print("KERNEL_OK")
</pallas_src>

<mosaic_0001>
module attributes {stable_mosaic.version = 11 : i64} {
  func.func @mlp_kernel(%arg0: i32, %arg1: memref<64x784xf32, #tpu.memory_space<vmem>>, %arg2: memref<784x512xf32, #tpu.memory_space<vmem>>, %arg3: memref<1x512xf32, #tpu.memory_space<vmem>>, %arg4: memref<512x128xf32, #tpu.memory_space<vmem>>, %arg5: memref<1x128xf32, #tpu.memory_space<vmem>>, %arg6: memref<64x128xf32, #tpu.memory_space<vmem>>) attributes {dimension_semantics = [#tpu.dimension_semantics<parallel>], iteration_bounds = array<i64: 1>, scalar_prefetch = 0 : i64, scratch_operands = 0 : i64, tpu.core_type = #tpu.core_type<tc>, window_params = [{transform_indices = @transform_0, window_bounds = array<i64: 64, 784>}, {pipeline_mode = #tpu.pipeline_mode<synchronous>, transform_indices = @transform_1, window_bounds = array<i64: 784, 512>}, {pipeline_mode = #tpu.pipeline_mode<synchronous>, transform_indices = @transform_2, window_bounds = array<i64: 1, 512>}, {pipeline_mode = #tpu.pipeline_mode<synchronous>, transform_indices = @transform_3, window_bounds = array<i64: 512, 128>}, {pipeline_mode = #tpu.pipeline_mode<synchronous>, transform_indices = @transform_4, window_bounds = array<i64: 1, 128>}, {transform_indices = @transform_5, window_bounds = array<i64: 64, 128>}]} {
    %c0 = arith.constant 0 : index
    %c0_0 = arith.constant 0 : index
    %0 = vector.load %arg1[%c0, %c0_0] : memref<64x784xf32, #tpu.memory_space<vmem>>, vector<64x784xf32>
    %c0_1 = arith.constant 0 : index
    %c0_2 = arith.constant 0 : index
    %1 = vector.load %arg2[%c0_1, %c0_2] : memref<784x512xf32, #tpu.memory_space<vmem>>, vector<784x512xf32>
    %cst = arith.constant dense<0.000000e+00> : vector<64x512xf32>
    %2 = tpu.matmul %0, %1, %cst {dimension_numbers = #tpu.dot_dimension_numbers<[1], [0], [0], [1], [0, 0, 1, 1], [], []>} : vector<64x784xf32>, vector<784x512xf32>, vector<64x512xf32> -> vector<64x512xf32>
    %c0_3 = arith.constant 0 : index
    %c0_4 = arith.constant 0 : index
    %3 = vector.load %arg3[%c0_3, %c0_4] : memref<1x512xf32, #tpu.memory_space<vmem>>, vector<1x512xf32>
    %4 = vector.broadcast %3 : vector<1x512xf32> to vector<64x512xf32>
    %5 = arith.addf %2, %4 : vector<64x512xf32>
    %cst_5 = arith.constant 0.000000e+00 : f32
    %6 = vector.broadcast %cst_5 : f32 to vector<64x512xf32>
    %7 = arith.maximumf %5, %6 : vector<64x512xf32>
    %c0_6 = arith.constant 0 : index
    %c0_7 = arith.constant 0 : index
    %8 = vector.load %arg4[%c0_6, %c0_7] : memref<512x128xf32, #tpu.memory_space<vmem>>, vector<512x128xf32>
    %cst_8 = arith.constant dense<0.000000e+00> : vector<64x128xf32>
    %9 = tpu.matmul %7, %8, %cst_8 {dimension_numbers = #tpu.dot_dimension_numbers<[1], [0], [0], [1], [0, 0, 1, 1], [], []>} : vector<64x512xf32>, vector<512x128xf32>, vector<64x128xf32> -> vector<64x128xf32>
    %c0_9 = arith.constant 0 : index
    %c0_10 = arith.constant 0 : index
    %10 = vector.load %arg5[%c0_9, %c0_10] : memref<1x128xf32, #tpu.memory_space<vmem>>, vector<1x128xf32>
    %11 = vector.broadcast %10 : vector<1x128xf32> to vector<64x128xf32>
    %12 = arith.addf %9, %11 : vector<64x128xf32>
    %c0_11 = arith.constant 0 : index
    %c0_12 = arith.constant 0 : index
    %13 = vector.load %arg6[%c0_11, %c0_12] : memref<64x128xf32, #tpu.memory_space<vmem>>, vector<64x128xf32>
    tpu.vector_store %arg6[%c0_11, %c0_12], %12 {strides = array<i32>} : memref<64x128xf32, #tpu.memory_space<vmem>>, vector<64x128xf32>,
    return
  }
  func.func @transform_0(%arg0: i32) -> (i32, i32) {
    %c0_i32 = arith.constant 0 : i32
    %c0_i32_0 = arith.constant 0 : i32
    return %arg0, %c0_i32 : i32, i32
  }
  func.func @transform_1(%arg0: i32) -> (i32, i32) {
    %c0_i32 = arith.constant 0 : i32
    %c0_i32_0 = arith.constant 0 : i32
    %c0_i32_1 = arith.constant 0 : i32
    return %c0_i32, %c0_i32_0 : i32, i32
  }
  func.func @transform_2(%arg0: i32) -> (i32, i32) {
    %c0_i32 = arith.constant 0 : i32
    %c0_i32_0 = arith.constant 0 : i32
    %c0_i32_1 = arith.constant 0 : i32
    return %c0_i32, %c0_i32_0 : i32, i32
  }
  func.func @transform_3(%arg0: i32) -> (i32, i32) {
    %c0_i32 = arith.constant 0 : i32
    %c0_i32_0 = arith.constant 0 : i32
    %c0_i32_1 = arith.constant 0 : i32
    return %c0_i32, %c0_i32_0 : i32, i32
  }
  func.func @transform_4(%arg0: i32) -> (i32, i32) {
    %c0_i32 = arith.constant 0 : i32
    %c0_i32_0 = arith.constant 0 : i32
    %c0_i32_1 = arith.constant 0 : i32
    return %c0_i32, %c0_i32_0 : i32, i32
  }
  func.func @transform_5(%arg0: i32) -> (i32, i32) {
    %c0_i32 = arith.constant 0 : i32
    %c0_i32_0 = arith.constant 0 : i32
    return %arg0, %c0_i32 : i32, i32
  }
}

</mosaic_0001>

<llo_original>
// kernel: tpu_custom_call.1
$region0: #{tpu_custom_call.1}
  #allocation0 [shape = 'u32[]', space=smem, size = 0x4, offset = 0x4, fixed_abs, tag = 'smem constant byte address 0x4 - core index']
  #allocation1 [shape = 'u32[144,128]{1,0:T(1,128)}', space=vmem, size = 0x12000, scoped, tag = 'internal scratch']
  %s0 = inlined_call_operand.hbm [shape: f32[64,784], index: 0, kind: input, shape index: {}]
  %s1 = inlined_call_operand.hbm [shape: f32[784,512], index: 1, kind: input, shape index: {}]
  %s2 = inlined_call_operand.hbm [shape: f32[1,512], index: 2, kind: input, shape index: {}]
  %s3 = inlined_call_operand.hbm [shape: f32[512,128], index: 3, kind: input, shape index: {}]
  %s4 = inlined_call_operand.hbm [shape: f32[1,128], index: 4, kind: input, shape index: {}]
  %s5 = inlined_call_operand.hbm [shape: f32[64,128], index: 5, kind: output, shape index: {}]
  %s6 = sld [smem:[#allocation0]]
  $region50: #{tpu_custom_call.1} parent=0
    _
  %s8 = ssub.s32 1, %s6
  %s9 = scalar_select 0, %s8, %s6
  $region1: #{tpu_custom_call.1} parent=0
    #allocation2 [shape = 'u8[229376]{0}', space=vmem, size = 0x38000, scoped, tag = 'input window, operand 0, single buffered']
    #allocation3 [shape = 's32[1]{0}', space=sflag, size = 0x4, scoped, tag = 'scoped memory for tpu_custom_call.1']
    #allocation4 [shape = 's32[1]{0}', space=sflag, size = 0x4, scoped, tag = 'scoped memory for tpu_custom_call.1']
    #allocation5 [shape = 'u8[1605632]{0}', space=vmem, size = 0x188000, scoped, tag = 'input window, operand 1, single buffered']
    #allocation6 [shape = 's32[1]{0}', space=sflag, size = 0x4, scoped, tag = 'scoped memory for tpu_custom_call.1']
    #allocation7 [shape = 'u8[2048]{0}', space=vmem, size = 0x800, scoped, tag = 'input window, operand 2, single buffered']
    #allocation8 [shape = 'u8[262144]{0}', space=vmem, size = 0x40000, scoped, tag = 'input window, operand 3, single buffered']
    #allocation9 [shape = 's32[1]{0}', space=sflag, size = 0x4, scoped, tag = 'scoped memory for tpu_custom_call.1']
    #allocation10 [shape = 'u8[512]{0}', space=vmem, size = 0x400, scoped, tag = 'input window, operand 4, single buffered']
    #allocation11 [shape = 'u8[32768]{0}', space=vmem, size = 0x8000, scoped, tag = 'output window, operand 0, single buffered']
    %10 = vsyncpa [#allocation3], 0
    %11 = vsyncpa [#allocation6], 0
    %12 = vsyncpa [#allocation9], 0
    %13 = vsyncpa [#allocation4], 0
    // Predicated region
    $region2: #{tpu_custom_call.1} parent=1 // pred_check
      _
    $region3: #{tpu_custom_call.1} parent=1 // pred_check_branch
      %15 = sbr.rel (0) target = $region5
    $region4: #{tpu_custom_call.1} parent=1 // pred_region
      %s17 = ssub.s32 7168, 7168
      %18 = vsyncadd [#allocation3], %s17
      %s19 = sshll.u32 [#allocation2], 4
      %s20 = int_to_ptr.vmem [resolvable:$true] %s19
      %25 = dma.hbm_to_vmem [thread:$0]  %s0, 7168, %s20, [#allocation3], 896, 896, 56
    $region5: #{tpu_custom_call.1} parent=1 // pred_fallthru
      _
    // Predicated region
    $region6: #{tpu_custom_call.1} parent=1 // pred_check
      _
    $region7: #{tpu_custom_call.1} parent=1 // pred_check_branch
      %27 = sbr.rel (0) target = $region9
    $region8: #{tpu_custom_call.1} parent=1 // pred_region
      %s29 = ssub.s32 50176, 50176
      %30 = vsyncadd [#allocation6], %s29
      %s31 = sshll.u32 [#allocation5], 4
      %s32 = int_to_ptr.vmem [resolvable:$true] %s31
      %37 = dma.hbm_to_vmem [thread:$0]  %s1, 50176, %s32, [#allocation6], 512, 512, 32
    $region9: #{tpu_custom_call.1} parent=1 // pred_fallthru
      _
    // Predicated region
    $region10: #{tpu_custom_call.1} parent=1 // pred_check
      _
    $region11: #{tpu_custom_call.1} parent=1 // pred_check_branch
      %39 = sbr.rel (0) target = $region13
    $region12: #{tpu_custom_call.1} parent=1 // pred_region
      %s41 = ssub.s32 64, 64
      %42 = vsyncadd [#allocation6], %s41
      %s44 = sshll.u32 [#allocation7], 4
      %s45 = int_to_ptr.vmem [resolvable:$true] %s44
      %47 = dma.hbm_to_vmem [thread:$0]  %s2, 64, %s45, [#allocation6]
    $region13: #{tpu_custom_call.1} parent=1 // pred_fallthru
      _
    // Predicated region
    $region14: #{tpu_custom_call.1} parent=1 // pred_check
      _
    $region15: #{tpu_custom_call.1} parent=1 // pred_check_branch
      %49 = sbr.rel (0) target = $region17
    $region16: #{tpu_custom_call.1} parent=1 // pred_region
      %s51 = ssub.s32 8192, 8192
      %52 = vsyncadd [#allocation9], %s51
      %s53 = sshll.u32 [#allocation8], 4
      %s54 = int_to_ptr.vmem [resolvable:$true] %s53
      %59 = dma.hbm_to_vmem [thread:$0]  %s3, 8192, %s54, [#allocation9], 128, 128, 8
    $region17: #{tpu_custom_call.1} parent=1 // pred_fallthru
      _
    // Predicated region
    $region18: #{tpu_custom_call.1} parent=1 // pred_check
      _
    $region19: #{tpu_custom_call.1} parent=1 // pred_check_branch
      %61 = sbr.rel (0) target = $region21
    $region20: #{tpu_custom_call.1} parent=1 // pred_region
      %s63 = ssub.s32 16, 16
      %64 = vsyncadd [#allocation9], %s63
      %s66 = sshll.u32 [#allocation10], 4
      %s67 = int_to_ptr.vmem [resolvable:$true] %s66
      %69 = dma.hbm_to_vmem [thread:$0]  %s4, 16, %s67, [#allocation9]
    $region21: #{tpu_custom_call.1} parent=1 // pred_fallthru
      _
    // Predicated region
    $region22: #{tpu_custom_call.1} parent=1 // pred_check
      _
    $region23: #{tpu_custom_call.1} parent=1 // pred_check_branch
      %71 = sbr.rel (0) target = $region25
    $region24: #{tpu_custom_call.1} parent=1 // pred_region
      %72 = dma.done [#allocation3], 7168
    $region25: #{tpu_custom_call.1} parent=1 // pred_fallthru
      _
    // Predicated region
    $region26: #{tpu_custom_call.1} parent=1 // pred_check
      _
    $region27: #{tpu_custom_call.1} parent=1 // pred_check_branch
      %74 = sbr.rel (0) target = $region29
    $region28: #{tpu_custom_call.1} parent=1 // pred_region
      %75 = dma.done [#allocation6], 50176
    $region29: #{tpu_custom_call.1} parent=1 // pred_fallthru
      _
    // Predicated region
    $region30: #{tpu_custom_call.1} parent=1 // pred_check
      _
    $region31: #{tpu_custom_call.1} parent=1 // pred_check_branch
      %77 = sbr.rel (0) target = $region33
    $region32: #{tpu_custom_call.1} parent=1 // pred_region
      %78 = dma.done [#allocation6], 64
    $region33: #{tpu_custom_call.1} parent=1 // pred_fallthru
      _
    // Predicated region
    $region34: #{tpu_custom_call.1} parent=1 // pred_check
      _
    $region35: #{tpu_custom_call.1} parent=1 // pred_check_branch
      %80 = sbr.rel (0) target = $region37
    $region36: #{tpu_custom_call.1} parent=1 // pred_region
      %81 = dma.done [#allocation9], 8192
    $region37: #{tpu_custom_call.1} parent=1 // pred_fallthru
      _
    // Predicated region
    $region38: #{tpu_custom_call.1} parent=1 // pred_check
      _
    $region39: #{tpu_custom_call.1} parent=1 // pred_check_branch
      %83 = sbr.rel (0) target = $region41
    $region40: #{tpu_custom_call.1} parent=1 // pred_region
      %84 = dma.done [#allocation9], 16
    $region41: #{tpu_custom_call.1} parent=1 // pred_fallthru
      _
    %v85 = vld [vmem:[#allocation2] sm:$0xff]
    %v86 = vld [vmem:[#allocation2 + $0x8] sm:$0xff]
    %v87 = vld [vmem:[#allocation2 + $0x10] sm:$0xff]
    %v88 = vld [vmem:[#allocation2 + $0x18] sm:$0xff]
    %v89 = vld [vmem:[#allocation2 + $0x20] sm:$0xff]
    %v90 = vld [vmem:[#allocation2 + $0x28] sm:$0xff]
    %v91 = vld [vmem:[#allocation2 + $0x30] sm:$0xff]
    %v92 = vld [vmem:[#allocation2 + $0x38] sm:$0xff]
    %v93 = vld [vmem:[#allocation2 + $0x40] sm:$0xff]
    %v94 = vld [vmem:[#allocation2 + $0x48] sm:$0xff]
    %v95 = vld [vmem:[#allocation2 + $0x50] sm:$0xff]
    %v96 = vld [vmem:[#allocation2 + $0x58] sm:$0xff]
    %v97 = vld [vmem:[#allocation2 + $0x60] sm:$0xff]
    %v98 = vld [vmem:[#allocation2 + $0x68] sm:$0xff]
    %v99 = vld [vmem:[#allocation2 + $0x70] sm:$0xff]
    %v100 = vld [vmem:[#allocation2 + $0x78] sm:$0xff]
    %v101 = vld [vmem:[#allocation2 + $0x80] sm:$0xff]
    %v102 = vld [vmem:[#allocation2 + $0x88] sm:$0xff]
    %v103 = vld [vmem:[#allocation2 + $0x90] sm:$0xff]
    %v104 = vld [vmem:[#allocation2 + $0x98] sm:$0xff]
    %v105 = vld [vmem:[#allocation2 + $0xa0] sm:$0xff]
    %v106 = vld [vmem:[#allocation2 + $0xa8] sm:$0xff]
    %v107 = vld [vmem:[#allocation2 + $0xb0] sm:$0xff]
    %v108 = vld [vmem:[#allocation2 + $0xb8] sm:$0xff]
    %v109 = vld [vmem:[#allocation2 + $0xc0] sm:$0xff]
    %v110 = vld [vmem:[#allocation2 + $0xc8] sm:$0xff]
    %v111 = vld [vmem:[#allocation2 + $0xd0] sm:$0xff]
    %v112 = vld [vmem:[#allocation2 + $0xd8] sm:$0xff]
    %v113 = vld [vmem:[#allocation2 + $0xe0] sm:$0xff]
    %v114 = vld [vmem:[#allocation2 + $0xe8] sm:$0xff]
    %v115 = vld [vmem:[#allocation2 + $0xf0] sm:$0xff]
    %v116 = vld [vmem:[#allocation2 + $0xf8] sm:$0xff]
    %v117 = vld [vmem:[#allocation2 + $0x100] sm:$0xff]
    %v118 = vld [vmem:[#allocation2 + $0x108] sm:$0xff]
    %v119 = vld [vmem:[#allocation2 + $0x110] sm:$0xff]
    %v120 = vld [vmem:[#allocation2 + $0x118] sm:$0xff]
    %v121 = vld [vmem:[#allocation2 + $0x120] sm:$0xff]
    %v122 = vld [vmem:[#allocation2 + $0x128] sm:$0xff]
    %v123 = vld [vmem:[#allocation2 + $0x130] sm:$0xff]
    %v124 = vld [vmem:[#allocation2 + $0x138] sm:$0xff]
    %v125 = vld [vmem:[#allocation2 + $0x140] sm:$0xff]
    %v126 = vld [vmem:[#allocation2 + $0x148] sm:$0xff]
    %v127 = vld [vmem:[#allocation2 + $0x150] sm:$0xff]
    %v128 = vld [vmem:[#allocation2 + $0x158] sm:$0xff]
    %v129 = vld [vmem:[#allocation2 + $0x160] sm:$0xff]
    %v130 = vld [vmem:[#allocation2 + $0x168] sm:$0xff]
    %v131 = vld [vmem:[#allocation2 + $0x170] sm:$0xff]
    %v132 = vld [vmem:[#allocation2 + $0x178] sm:$0xff]
    %v133 = vld [vmem:[#allocation2 + $0x180] sm:$0xff]
    %v134 = vld [vmem:[#allocation2 + $0x188] sm:$0xff]
    %v135 = vld [vmem:[#allocation2 + $0x190] sm:$0xff]
    %v136 = vld [vmem:[#allocation2 + $0x198] sm:$0xff]
    %v137 = vld [vmem:[#allocation2 + $0x1a0] sm:$0xff]
    %v138 = vld [vmem:[#allocation2 + $0x1a8] sm:$0xff]
    %v139 = vld [vmem:[#allocation2 + $0x1b0] sm:$0xff]
    %v140 = vld [vmem:[#allocation2 + $0x1b8] sm:$0xff]
    %v141 = vld [vmem:[#allocation5] sm:$0xff]
    %v142 = vld [vmem:[#allocation5 + $0x8] sm:$0xff]
    %v143 = vld [vmem:[#allocation5 + $0x10] sm:$0xff]
    %v144 = vld [vmem:[#allocation5 + $0x18] sm:$0xff]
    %v145 = vld [vmem:[#allocation5 + $0x20] sm:$0xff]
    %v146 = vld [vmem:[#allocation5 + $0x28] sm:$0xff]
    %v147 = vld [vmem:[#allocation5 + $0x30] sm:$0xff]
    %v148 = vld [vmem:[#allocation5 + $0x38] sm:$0xff]
    %v149 = vld [vmem:[#allocation5 + $0x40] sm:$0xff]
    %v150 = vld [vmem:[#allocation5 + $0x48] sm:$0xff]
    %v151 = vld [vmem:[#allocation5 + $0x50] sm:$0xff]
    %v152 = vld [vmem:[#allocation5 + $0x58] sm:$0xff]
    %v153 = vld [vmem:[#allocation5 + $0x60] sm:$0xff]
    %v154 = vld [vmem:[#allocation5 + $0x68] sm:$0xff]
    %v155 = vld [vmem:[#allocation5 + $0x70] sm:$0xff]
    %v156 = vld [vmem:[#allocation5 + $0x78] sm:$0xff]
    %v157 = vld [vmem:[#allocation5 + $0x80] sm:$0xff]
    %v158 = vld [vmem:[#allocation5 + $0x88] sm:$0xff]
    %v159 = vld [vmem:[#allocation5 + $0x90] sm:$0xff]
    %v160 = vld [vmem:[#allocation5 + $0x98] sm:$0xff]
    %v161 = vld [vmem:[#allocation5 + $0xa0] sm:$0xff]
    %v162 = vld [vmem:[#allocation5 + $0xa8] sm:$0xff]
    %v163 = vld [vmem:[#allocation5 + $0xb0] sm:$0xff]
    %v164 = vld [vmem:[#allocation5 + $0xb8] sm:$0xff]
    %v165 = vld [vmem:[#allocation5 + $0xc0] sm:$0xff]
    %v166 = vld [vmem:[#allocation5 + $0xc8] sm:$0xff]
    %v167 = vld [vmem:[#allocation5 + $0xd0] sm:$0xff]
    %v168 = vld [vmem:[#allocation5 + $0xd8] sm:$0xff]
    %v169 = vld [vmem:[#allocation5 + $0xe0] sm:$0xff]
    %v170 = vld [vmem:[#allocation5 + $0xe8] sm:$0xff]
    %v171 = vld [vmem:[#allocation5 + $0xf0] sm:$0xff]
    %v172 = vld [vmem:[#allocation5 + $0xf8] sm:$0xff]
    %v173 = vld [vmem:[#allocation5 + $0x100] sm:$0xff]
    %v174 = vld [vmem:[#allocation5 + $0x108] sm:$0xff]
    %v175 = vld [vmem:[#allocation5 + $0x110] sm:$0xff]
    %v176 = vld [vmem:[#allocation5 + $0x118] sm:$0xff]
    %v177 = vld [vmem:[#allocation5 + $0x120] sm:$0xff]
    %v178 = vld [vmem:[#allocation5 + $0x128] sm:$0xff]
    %v179 = vld [vmem:[#allocation5 + $0x130] sm:$0xff]
    %v180 = vld [vmem:[#allocation5 + $0x138] sm:$0xff]
    %v181 = vld [vmem:[#allocation5 + $0x140] sm:$0xff]
    %v182 = vld [vmem:[#allocation5 + $0x148] sm:$0xff]
    %v183 = vld [vmem:[#allocation5 + $0x150] sm:$0xff]
    %v184 = vld [vmem:[#allocation5 + $0x158] sm:$0xff]
    %v185 = vld [vmem:[#allocation5 + $0x160] sm:$0xff]
    %v186 = vld [vmem:[#allocation5 + $0x168] sm:$0xff]
    %v187 = vld [vmem:[#allocation5 + $0x170] sm:$0xff]
    %v188 = vld [vmem:[#allocation5 + $0x178] sm:$0xff]
    %v189 = vld [vmem:[#allocation5 + $0x180] sm:$0xff]
    %v190 = vld [vmem:[#allocation5 + $0x188] sm:$0xff]
    %v191 = vld [vmem:[#allocation5 + $0x190] sm:$0xff]
    %v192 = vld [vmem:[#allocation5 + $0x198] sm:$0xff]
    %v193 = vld [vmem:[#allocation5 + $0x1a0] sm:$0xff]
    %v194 = vld [vmem:[#allocation5 + $0x1a8] sm:$0xff]
    %v195 = vld [vmem:[#allocation5 + $0x1b0] sm:$0xff]
    %v196 = vld [vmem:[#allocation5 + $0x1b8] sm:$0xff]
    %v197 = vld [vmem:[#allocation5 + $0x1c0] sm:$0xff]
    %v198 = vld [vmem:[#allocation5 + $0x1c8] sm:$0xff]
    %v199 = vld [vmem:[#allocation5 + $0x1d0] sm:$0xff]
    %v200 = vld [vmem:[#allocation5 + $0x1d8] sm:$0xff]
    %v201 = vld [vmem:[#allocation5 + $0x1e0] sm:$0xff]
    %v202 = vld [vmem:[#allocation5 + $0x1e8] sm:$0xff]
    %v203 = vld [vmem:[#allocation5 + $0x1f0] sm:$0xff]
    %v204 = vld [vmem:[#allocation5 + $0x1f8] sm:$0xff]
    %v205 = vld [vmem:[#allocation5 + $0x200] sm:$0xff]
    %v206 = vld [vmem:[#allocation5 + $0x208] sm:$0xff]
    %v207 = vld [vmem:[#allocation5 + $0x210] sm:$0xff]
    %v208 = vld [vmem:[#allocation5 + $0x218] sm:$0xff]
    %v209 = vld [vmem:[#allocation5 + $0x220] sm:$0xff]
    %v210 = vld [vmem:[#allocation5 + $0x228] sm:$0xff]
    %v211 = vld [vmem:[#allocation5 + $0x230] sm:$0xff]
    %v212 = vld [vmem:[#allocation5 + $0x238] sm:$0xff]
    %v213 = vld [vmem:[#allocation5 + $0x240] sm:$0xff]
    %v214 = vld [vmem:[#allocation5 + $0x248] sm:$0xff]
    %v215 = vld [vmem:[#allocation5 + $0x250] sm:$0xff]
    %v216 = vld [vmem:[#allocation5 + $0x258] sm:$0xff]
    %v217 = vld [vmem:[#allocation5 + $0x260] sm:$0xff]
    %v218 = vld [vmem:[#allocation5 + $0x268] sm:$0xff]
    %v219 = vld [vmem:[#allocation5 + $0x270] sm:$0xff]
    %v220 = vld [vmem:[#allocation5 + $0x278] sm:$0xff]
    %v221 = vld [vmem:[#allocation5 + $0x280] sm:$0xff]
    %v222 = vld [vmem:[#allocation5 + $0x288] sm:$0xff]
    %v223 = vld [vmem:[#allocation5 + $0x290] sm:$0xff]
    %v224 = vld [vmem:[#allocation5 + $0x298] sm:$0xff]
    %v225 = vld [vmem:[#allocation5 + $0x2a0] sm:$0xff]
    %v226 = vld [vmem:[#allocation5 + $0x2a8] sm:$0xff]
    %v227 = vld [vmem:[#allocation5 + $0x2b0] sm:$0xff]
    %v228 = vld [vmem:[#allocation5 + $0x2b8] sm:$0xff]
    %v229 = vld [vmem:[#allocation5 + $0x2c0] sm:$0xff]
    %v230 = vld [vmem:[#allocation5 + $0x2c8] sm:$0xff]
    %v231 = vld [vmem:[#allocation5 + $0x2d0] sm:$0xff]
    %v232 = vld [vmem:[#allocation5 + $0x2d8] sm:$0xff]
    %v233 = vld [vmem:[#allocation5 + $0x2e0] sm:$0xff]
    %v234 = vld [vmem:[#allocation5 + $0x2e8] sm:$0xff]
    %v235 = vld [vmem:[#allocation5 + $0x2f0] sm:$0xff]
    %v236 = vld [vmem:[#allocation5 + $0x2f8] sm:$0xff]
    %v237 = vld [vmem:[#allocation5 + $0x300] sm:$0xff]
    %v238 = vld [vmem:[#allocation5 + $0x308] sm:$0xff]
    %v239 = vld [vmem:[#allocation5 + $0x310] sm:$0xff]
    %v240 = vld [vmem:[#allocation5 + $0x318] sm:$0xff]
    %v241 = vld [vmem:[#allocation5 + $0x320] sm:$0xff]
    %v242 = vld [vmem:[#allocation5 + $0x328] sm:$0xff]
    %v243 = vld [vmem:[#allocation5 + $0x330] sm:$0xff]
    %v244 = vld [vmem:[#allocation5 + $0x338] sm:$0xff]
    %v245 = vld [vmem:[#allocation5 + $0x340] sm:$0xff]
    %v246 = vld [vmem:[#allocation5 + $0x348] sm:$0xff]
    %v247 = vld [vmem:[#allocation5 + $0x350] sm:$0xff]
    %v248 = vld [vmem:[#allocation5 + $0x358] sm:$0xff]
    %v249 = vld [vmem:[#allocation5 + $0x360] sm:$0xff]
    %v250 = vld [vmem:[#allocation5 + $0x368] sm:$0xff]
    %v251 = vld [vmem:[#allocation5 + $0x370] sm:$0xff]
    %v252 = vld [vmem:[#allocation5 + $0x378] sm:$0xff]
    %v253 = vld [vmem:[#allocation5 + $0x380] sm:$0xff]
    %v254 = vld [vmem:[#allocation5 + $0x388] sm:$0xff]
    %v255 = vld [vmem:[#allocation5 + $0x390] sm:$0xff]
    %v256 = vld [vmem:[#allocation5 + $0x398] sm:$0xff]
    %v257 = vld [vmem:[#allocation5 + $0x3a0] sm:$0xff]
    %v258 = vld [vmem:[#allocation5 + $0x3a8] sm:$0xff]
    %v259 = vld [vmem:[#allocation5 + $0x3b0] sm:$0xff]
    %v260 = vld [vmem:[#allocation5 + $0x3b8] sm:$0xff]
    %v261 = vld [vmem:[#allocation5 + $0x3c0] sm:$0xff]
    %v262 = vld [vmem:[#allocation5 + $0x3c8] sm:$0xff]
    %v263 = vld [vmem:[#allocation5 + $0x3d0] sm:$0xff]
    %v264 = vld [vmem:[#allocation5 + $0x3d8] sm:$0xff]
    %v265 = vld [vmem:[#allocation5 + $0x3e0] sm:$0xff]
    %v266 = vld [vmem:[#allocation5 + $0x3e8] sm:$0xff]
    %v267 = vld [vmem:[#allocation5 + $0x3f0] sm:$0xff]
    %v268 = vld [vmem:[#allocation5 + $0x3f8] sm:$0xff]
    %v269 = vld [vmem:[#allocation5 + $0x400] sm:$0xff]
    %v270 = vld [vmem:[#allocation5 + $0x408] sm:$0xff]
    %v271 = vld [vmem:[#allocation5 + $0x410] sm:$0xff]
    %v272 = vld [vmem:[#allocation5 + $0x418] sm:$0xff]
    %v273 = vld [vmem:[#allocation5 + $0x420] sm:$0xff]
    %v274 = vld [vmem:[#allocation5 + $0x428] sm:$0xff]
    %v275 = vld [vmem:[#allocation5 + $0x430] sm:$0xff]
    %v276 = vld [vmem:[#allocation5 + $0x438] sm:$0xff]
    %v277 = vld [vmem:[#allocation5 + $0x440] sm:$0xff]
    %v278 = vld [vmem:[#allocation5 + $0x448] sm:$0xff]
    %v279 = vld [vmem:[#allocation5 + $0x450] sm:$0xff]
    %v280 = vld [vmem:[#allocation5 + $0x458] sm:$0xff]
    %v281 = vld [vmem:[#allocation5 + $0x460] sm:$0xff]
    %v282 = vld [vmem:[#allocation5 + $0x468] sm:$0xff]
    %v283 = vld [vmem:[#allocation5 + $0x470] sm:$0xff]
    %v284 = vld [vmem:[#allocation5 + $0x478] sm:$0xff]
    %v285 = vld [vmem:[#allocation5 + $0x480] sm:$0xff]
    %v286 = vld [vmem:[#allocation5 + $0x488] sm:$0xff]
    %v287 = vld [vmem:[#allocation5 + $0x490] sm:$0xff]
    %v288 = vld [vmem:[#allocation5 + $0x498] sm:$0xff]
    %v289 = vld [vmem:[#allocation5 + $0x4a0] sm:$0xff]
    %v290 = vld [vmem:[#allocation5 + $0x4a8] sm:$0xff]
    %v291 = vld [vmem:[#allocation5 + $0x4b0] sm:$0xff]
    %v292 = vld [vmem:[#allocation5 + $0x4b8] sm:$0xff]
    %v293 = vld [vmem:[#allocation5 + $0x4c0] sm:$0xff]
    %v294 = vld [vmem:[#allocation5 + $0x4c8] sm:$0xff]
    %v295 = vld [vmem:[#allocation5 + $0x4d0] sm:$0xff]
    %v296 = vld [vmem:[#allocation5 + $0x4d8] sm:$0xff]
    %v297 = vld [vmem:[#allocation5 + $0x4e0] sm:$0xff]
    %v298 = vld [vmem:[#allocation5 + $0x4e8] sm:$0xff]
    %v299 = vld [vmem:[#allocation5 + $0x4f0] sm:$0xff]
    %v300 = vld [vmem:[#allocation5 + $0x4f8] sm:$0xff]
    %v301 = vld [vmem:[#allocation5 + $0x500] sm:$0xff]
    %v302 = vld [vmem:[#allocation5 + $0x508] sm:$0xff]
    %v303 = vld [vmem:[#allocation5 + $0x510] sm:$0xff]
    %v304 = vld [vmem:[#allocation5 + $0x518] sm:$0xff]
    %v305 = vld [vmem:[#allocation5 + $0x520] sm:$0xff]
    %v306 = vld [vmem:[#allocation5 + $0x528] sm:$0xff]
    %v307 = vld [vmem:[#allocation5 + $0x530] sm:$0xff]
    %v308 = vld [vmem:[#allocation5 + $0x538] sm:$0xff]
    %v309 = vld [vmem:[#allocation5 + $0x540] sm:$0xff]
    %v310 = vld [vmem:[#allocation5 + $0x548] sm:$0xff]
    %v311 = vld [vmem:[#allocation5 + $0x550] sm:$0xff]
    %v312 = vld [vmem:[#allocation5 + $0x558] sm:$0xff]
    %v313 = vld [vmem:[#allocation5 + $0x560] sm:$0xff]
    %v314 = vld [vmem:[#allocation5 + $0x568] sm:$0xff]
    %v315 = vld [vmem:[#allocation5 + $0x570] sm:$0xff]
    %v316 = vld [vmem:[#allocation5 + $0x578] sm:$0xff]
    %v317 = vld [vmem:[#allocation5 + $0x580] sm:$0xff]
    %v318 = vld [vmem:[#allocation5 + $0x588] sm:$0xff]
    %v319 = vld [vmem:[#allocation5 + $0x590] sm:$0xff]
    %v320 = vld [vmem:[#allocation5 + $0x598] sm:$0xff]
    %v321 = vld [vmem:[#allocation5 + $0x5a0] sm:$0xff]
    %v322 = vld [vmem:[#allocation5 + $0x5a8] sm:$0xff]
    %v323 = vld [vmem:[#allocation5 + $0x5b0] sm:$0xff]
    %v324 = vld [vmem:[#allocation5 + $0x5b8] sm:$0xff]
    %v325 = vld [vmem:[#allocation5 + $0x5c0] sm:$0xff]
    %v326 = vld [vmem:[#allocation5 + $0x5c8] sm:$0xff]
    %v327 = vld [vmem:[#allocation5 + $0x5d0] sm:$0xff]
    %v328 = vld [vmem:[#allocation5 + $0x5d8] sm:$0xff]
    %v329 = vld [vmem:[#allocation5 + $0x5e0] sm:$0xff]
    %v330 = vld [vmem:[#allocation5 + $0x5e8] sm:$0xff]
    %v331 = vld [vmem:[#allocation5 + $0x5f0] sm:$0xff]
    %v332 = vld [vmem:[#allocation5 + $0x5f8] sm:$0xff]
    %v333 = vld [vmem:[#allocation5 + $0x600] sm:$0xff]
    %v334 = vld [vmem:[#allocation5 + $0x608] sm:$0xff]
    %v335 = vld [vmem:[#allocation5 + $0x610] sm:$0xff]
    %v336 = vld [vmem:[#allocation5 + $0x618] sm:$0xff]
    %v337 = vld [vmem:[#allocation5 + $0x620] sm:$0xff]
    %v338 = vld [vmem:[#allocation5 + $0x628] sm:$0xff]
    %v339 = vld [vmem:[#allocation5 + $0x630] sm:$0xff]
    %v340 = vld [vmem:[#allocation5 + $0x638] sm:$0xff]
    %v341 = vld [vmem:[#allocation5 + $0x640] sm:$0xff]
    %v342 = vld [vmem:[#allocation5 + $0x648] sm:$0xff]
    %v343 = vld [vmem:[#allocation5 + $0x650] sm:$0xff]
    %v344 = vld [vmem:[#allocation5 + $0x658] sm:$0xff]
    %v345 = vld [vmem:[#allocation5 + $0x660] sm:$0xff]
    %v346 = vld [vmem:[#allocation5 + $0x668] sm:$0xff]
    %v347 = vld [vmem:[#allocation5 + $0x670] sm:$0xff]
    %v348 = vld [vmem:[#allocation5 + $0x678] sm:$0xff]
    %v349 = vld [vmem:[#allocation5 + $0x680] sm:$0xff]
    %v350 = vld [vmem:[#allocation5 + $0x688] sm:$0xff]
    %v351 = vld [vmem:[#allocation5 + $0x690] sm:$0xff]
    %v352 = vld [vmem:[#allocation5 + $0x698] sm:$0xff]
    %v353 = vld [vmem:[#allocation5 + $0x6a0] sm:$0xff]
    %v354 = vld [vmem:[#allocation5 + $0x6a8] sm:$0xff]
    %v355 = vld [vmem:[#allocation5 + $0x6b0] sm:$0xff]
    %v356 = vld [vmem:[#allocation5 + $0x6b8] sm:$0xff]
    %v357 = vld [vmem:[#allocation5 + $0x6c0] sm:$0xff]
    %v358 = vld [vmem:[#allocation5 + $0x6c8] sm:$0xff]
    %v359 = vld [vmem:[#allocation5 + $0x6d0] sm:$0xff]
    %v360 = vld [vmem:[#allocation5 + $0x6d8] sm:$0xff]
    %v361 = vld [vmem:[#allocation5 + $0x6e0] sm:$0xff]
    %v362 = vld [vmem:[#allocation5 + $0x6e8] sm:$0xff]
    %v363 = vld [vmem:[#allocation5 + $0x6f0] sm:$0xff]
    %v364 = vld [vmem:[#allocation5 + $0x6f8] sm:$0xff]
    %v365 = vld [vmem:[#allocation5 + $0x700] sm:$0xff]
    %v366 = vld [vmem:[#allocation5 + $0x708] sm:$0xff]
    %v367 = vld [vmem:[#allocation5 + $0x710] sm:$0xff]
    %v368 = vld [vmem:[#allocation5 + $0x718] sm:$0xff]
    %v369 = vld [vmem:[#allocation5 + $0x720] sm:$0xff]
    %v370 = vld [vmem:[#allocation5 + $0x728] sm:$0xff]
    %v371 = vld [vmem:[#allocation5 + $0x730] sm:$0xff]
    %v372 = vld [vmem:[#allocation5 + $0x738] sm:$0xff]
    %v373 = vld [vmem:[#allocation5 + $0x740] sm:$0xff]
    %v374 = vld [vmem:[#allocation5 + $0x748] sm:$0xff]
    %v375 = vld [vmem:[#allocation5 + $0x750] sm:$0xff]
    %v376 = vld [vmem:[#allocation5 + $0x758] sm:$0xff]
    %v377 = vld [vmem:[#allocation5 + $0x760] sm:$0xff]
    %v378 = vld [vmem:[#allocation5 + $0x768] sm:$0xff]
    %v379 = vld [vmem:[#allocation5 + $0x770] sm:$0xff]
    %v380 = vld [vmem:[#allocation5 + $0x778] sm:$0xff]
    %v381 = vld [vmem:[#allocation5 + $0x780] sm:$0xff]
    %v382 = vld [vmem:[#allocation5 + $0x788] sm:$0xff]
    %v383 = vld [vmem:[#allocation5 + $0x790] sm:$0xff]
    %v384 = vld [vmem:[#allocation5 + $0x798] sm:$0xff]
    %v385 = vld [vmem:[#allocation5 + $0x7a0] sm:$0xff]
    %v386 = vld [vmem:[#allocation5 + $0x7a8] sm:$0xff]
    %v387 = vld [vmem:[#allocation5 + $0x7b0] sm:$0xff]
    %v388 = vld [vmem:[#allocation5 + $0x7b8] sm:$0xff]
    %v389 = vld [vmem:[#allocation5 + $0x7c0] sm:$0xff]
    %v390 = vld [vmem:[#allocation5 + $0x7c8] sm:$0xff]
    %v391 = vld [vmem:[#allocation5 + $0x7d0] sm:$0xff]
    %v392 = vld [vmem:[#allocation5 + $0x7d8] sm:$0xff]
    %v393 = vld [vmem:[#allocation5 + $0x7e0] sm:$0xff]
    %v394 = vld [vmem:[#allocation5 + $0x7e8] sm:$0xff]
    %v395 = vld [vmem:[#allocation5 + $0x7f0] sm:$0xff]
    %v396 = vld [vmem:[#allocation5 + $0x7f8] sm:$0xff]
    %v397 = vld [vmem:[#allocation5 + $0x800] sm:$0xff]
    %v398 = vld [vmem:[#allocation5 + $0x808] sm:$0xff]
    %v399 = vld [vmem:[#allocation5 + $0x810] sm:$0xff]
    %v400 = vld [vmem:[#allocation5 + $0x818] sm:$0xff]
    %v401 = vld [vmem:[#allocation5 + $0x820] sm:$0xff]
    %v402 = vld [vmem:[#allocation5 + $0x828] sm:$0xff]
    %v403 = vld [vmem:[#allocation5 + $0x830] sm:$0xff]
    %v404 = vld [vmem:[#allocation5 + $0x838] sm:$0xff]
    %v405 = vld [vmem:[#allocation5 + $0x840] sm:$0xff]
    %v406 = vld [vmem:[#allocation5 + $0x848] sm:$0xff]
    %v407 = vld [vmem:[#allocation5 + $0x850] sm:$0xff]
    %v408 = vld [vmem:[#allocation5 + $0x858] sm:$0xff]
    %v409 = vld [vmem:[#allocation5 + $0x860] sm:$0xff]
    %v410 = vld [vmem:[#allocation5 + $0x868] sm:$0xff]
    %v411 = vld [vmem:[#allocation5 + $0x870] sm:$0xff]
    %v412 = vld [vmem:[#allocation5 + $0x878] sm:$0xff]
    %v413 = vld [vmem:[#allocation5 + $0x880] sm:$0xff]
    %v414 = vld [vmem:[#allocation5 + $0x888] sm:$0xff]
    %v415 = vld [vmem:[#allocation5 + $0x890] sm:$0xff]
    %v416 = vld [vmem:[#allocation5 + $0x898] sm:$0xff]
    %v417 = vld [vmem:[#allocation5 + $0x8a0] sm:$0xff]
    %v418 = vld [vmem:[#allocation5 + $0x8a8] sm:$0xff]
    %v419 = vld [vmem:[#allocation5 + $0x8b0] sm:$0xff]
    %v420 = vld [vmem:[#allocation5 + $0x8b8] sm:$0xff]
    %v421 = vld [vmem:[#allocation5 + $0x8c0] sm:$0xff]
    %v422 = vld [vmem:[#allocation5 + $0x8c8] sm:$0xff]
    %v423 = vld [vmem:[#allocation5 + $0x8d0] sm:$0xff]
    %v424 = vld [vmem:[#allocation5 + $0x8d8] sm:$0xff]
    %v425 = vld [vmem:[#allocation5 + $0x8e0] sm:$0xff]
    %v426 = vld [vmem:[#allocation5 + $0x8e8] sm:$0xff]
    %v427 = vld [vmem:[#allocation5 + $0x8f0] sm:$0xff]
    %v428 = vld [vmem:[#allocation5 + $0x8f8] sm:$0xff]
    %v429 = vld [vmem:[#allocation5 + $0x900] sm:$0xff]
    %v430 = vld [vmem:[#allocation5 + $0x908] sm:$0xff]
    %v431 = vld [vmem:[#allocation5 + $0x910] sm:$0xff]
    %v432 = vld [vmem:[#allocation5 + $0x918] sm:$0xff]
    %v433 = vld [vmem:[#allocation5 + $0x920] sm:$0xff]
    %v434 = vld [vmem:[#allocation5 + $0x928] sm:$0xff]
    %v435 = vld [vmem:[#allocation5 + $0x930] sm:$0xff]
    %v436 = vld [vmem:[#allocation5 + $0x938] sm:$0xff]
    %v437 = vld [vmem:[#allocation5 + $0x940] sm:$0xff]
    %v438 = vld [vmem:[#allocation5 + $0x948] sm:$0xff]
    %v439 = vld [vmem:[#allocation5 + $0x950] sm:$0xff]
    %v440 = vld [vmem:[#allocation5 + $0x958] sm:$0xff]
    %v441 = vld [vmem:[#allocation5 + $0x960] sm:$0xff]
    %v442 = vld [vmem:[#allocation5 + $0x968] sm:$0xff]
    %v443 = vld [vmem:[#allocation5 + $0x970] sm:$0xff]
    %v444 = vld [vmem:[#allocation5 + $0x978] sm:$0xff]
    %v445 = vld [vmem:[#allocation5 + $0x980] sm:$0xff]
    %v446 = vld [vmem:[#allocation5 + $0x988] sm:$0xff]
    %v447 = vld [vmem:[#allocation5 + $0x990] sm:$0xff]
    %v448 = vld [vmem:[#allocation5 + $0x998] sm:$0xff]
    %v449 = vld [vmem:[#allocation5 + $0x9a0] sm:$0xff]
    %v450 = vld [vmem:[#allocation5 + $0x9a8] sm:$0xff]
    %v451 = vld [vmem:[#allocation5 + $0x9b0] sm:$0xff]
    %v452 = vld [vmem:[#allocation5 + $0x9b8] sm:$0xff]
    %v453 = vld [vmem:[#allocation5 + $0x9c0] sm:$0xff]
    %v454 = vld [vmem:[#allocation5 + $0x9c8] sm:$0xff]
    %v455 = vld [vmem:[#allocation5 + $0x9d0] sm:$0xff]
    %v456 = vld [vmem:[#allocation5 + $0x9d8] sm:$0xff]
    %v457 = vld [vmem:[#allocation5 + $0x9e0] sm:$0xff]
    %v458 = vld [vmem:[#allocation5 + $0x9e8] sm:$0xff]
    %v459 = vld [vmem:[#allocation5 + $0x9f0] sm:$0xff]
    %v460 = vld [vmem:[#allocation5 + $0x9f8] sm:$0xff]
    %v461 = vld [vmem:[#allocation5 + $0xa00] sm:$0xff]
    %v462 = vld [vmem:[#allocation5 + $0xa08] sm:$0xff]
    %v463 = vld [vmem:[#allocation5 + $0xa10] sm:$0xff]
    %v464 = vld [vmem:[#allocation5 + $0xa18] sm:$0xff]
    %v465 = vld [vmem:[#allocation5 + $0xa20] sm:$0xff]
    %v466 = vld [vmem:[#allocation5 + $0xa28] sm:$0xff]
    %v467 = vld [vmem:[#allocation5 + $0xa30] sm:$0xff]
    %v468 = vld [vmem:[#allocation5 + $0xa38] sm:$0xff]
    %v469 = vld [vmem:[#allocation5 + $0xa40] sm:$0xff]
    %v470 = vld [vmem:[#allocation5 + $0xa48] sm:$0xff]
    %v471 = vld [vmem:[#allocation5 + $0xa50] sm:$0xff]
    %v472 = vld [vmem:[#allocation5 + $0xa58] sm:$0xff]
    %v473 = vld [vmem:[#allocation5 + $0xa60] sm:$0xff]
    %v474 = vld [vmem:[#allocation5 + $0xa68] sm:$0xff]
    %v475 = vld [vmem:[#allocation5 + $0xa70] sm:$0xff]
    %v476 = vld [vmem:[#allocation5 + $0xa78] sm:$0xff]
    %v477 = vld [vmem:[#allocation5 + $0xa80] sm:$0xff]
    %v478 = vld [vmem:[#allocation5 + $0xa88] sm:$0xff]
    %v479 = vld [vmem:[#allocation5 + $0xa90] sm:$0xff]
    %v480 = vld [vmem:[#allocation5 + $0xa98] sm:$0xff]
    %v481 = vld [vmem:[#allocation5 + $0xaa0] sm:$0xff]
    %v482 = vld [vmem:[#allocation5 + $0xaa8] sm:$0xff]
    %v483 = vld [vmem:[#allocation5 + $0xab0] sm:$0xff]
    %v484 = vld [vmem:[#allocation5 + $0xab8] sm:$0xff]
    %v485 = vld [vmem:[#allocation5 + $0xac0] sm:$0xff]
    %v486 = vld [vmem:[#allocation5 + $0xac8] sm:$0xff]
    %v487 = vld [vmem:[#allocation5 + $0xad0] sm:$0xff]
    %v488 = vld [vmem:[#allocation5 + $0xad8] sm:$0xff]
    %v489 = vld [vmem:[#allocation5 + $0xae0] sm:$0xff]
    %v490 = vld [vmem:[#allocation5 + $0xae8] sm:$0xff]
    %v491 = vld [vmem:[#allocation5 + $0xaf0] sm:$0xff]
    %v492 = vld [vmem:[#allocation5 + $0xaf8] sm:$0xff]
    %v493 = vld [vmem:[#allocation5 + $0xb00] sm:$0xff]
    %v494 = vld [vmem:[#allocation5 + $0xb08] sm:$0xff]
    %v495 = vld [vmem:[#allocation5 + $0xb10] sm:$0xff]
    %v496 = vld [vmem:[#allocation5 + $0xb18] sm:$0xff]
    %v497 = vld [vmem:[#allocation5 + $0xb20] sm:$0xff]
    %v498 = vld [vmem:[#allocation5 + $0xb28] sm:$0xff]
    %v499 = vld [vmem:[#allocation5 + $0xb30] sm:$0xff]
    %v500 = vld [vmem:[#allocation5 + $0xb38] sm:$0xff]
    %v501 = vld [vmem:[#allocation5 + $0xb40] sm:$0xff]
    %v502 = vld [vmem:[#allocation5 + $0xb48] sm:$0xff]
    %v503 = vld [vmem:[#allocation5 + $0xb50] sm:$0xff]
    %v504 = vld [vmem:[#allocation5 + $0xb58] sm:$0xff]
    %v505 = vld [vmem:[#allocation5 + $0xb60] sm:$0xff]
    %v506 = vld [vmem:[#allocation5 + $0xb68] sm:$0xff]
    %v507 = vld [vmem:[#allocation5 + $0xb70] sm:$0xff]
    %v508 = vld [vmem:[#allocation5 + $0xb78] sm:$0xff]
    %v509 = vld [vmem:[#allocation5 + $0xb80] sm:$0xff]
    %v510 = vld [vmem:[#allocation5 + $0xb88] sm:$0xff]
    %v511 = vld [vmem:[#allocation5 + $0xb90] sm:$0xff]
    %v512 = vld [vmem:[#allocation5 + $0xb98] sm:$0xff]
    %v513 = vld [vmem:[#allocation5 + $0xba0] sm:$0xff]
    %v514 = vld [vmem:[#allocation5 + $0xba8] sm:$0xff]
    %v515 = vld [vmem:[#allocation5 + $0xbb0] sm:$0xff]
    %v516 = vld [vmem:[#allocation5 + $0xbb8] sm:$0xff]
    %v517 = vld [vmem:[#allocation5 + $0xbc0] sm:$0xff]
    %v518 = vld [vmem:[#allocation5 + $0xbc8] sm:$0xff]
    %v519 = vld [vmem:[#allocation5 + $0xbd0] sm:$0xff]
    %v520 = vld [vmem:[#allocation5 + $0xbd8] sm:$0xff]
    %v521 = vld [vmem:[#allocation5 + $0xbe0] sm:$0xff]
    %v522 = vld [vmem:[#allocation5 + $0xbe8] sm:$0xff]
    %v523 = vld [vmem:[#allocation5 + $0xbf0] sm:$0xff]
    %v524 = vld [vmem:[#allocation5 + $0xbf8] sm:$0xff]
    %v525 = vld [vmem:[#allocation5 + $0xc00] sm:$0xff]
    %v526 = vld [vmem:[#allocation5 + $0xc08] sm:$0xff]
    %v527 = vld [vmem:[#allocation5 + $0xc10] sm:$0xff]
    %v528 = vld [vmem:[#allocation5 + $0xc18] sm:$0xff]
    %v529 = vld [vmem:[#allocation5 + $0xc20] sm:$0xff]
    %v530 = vld [vmem:[#allocation5 + $0xc28] sm:$0xff]
    %v531 = vld [vmem:[#allocation5 + $0xc30] sm:$0xff]
    %v532 = vld [vmem:[#allocation5 + $0xc38] sm:$0xff]
    %v533 = vld [vmem:[#allocation7] sm:$0xf]
    %v535 = vlaneseq
    %v536 = vshrl.u32 %v535, 7
    %v537 = vsub.s32 0, %v536
    %v538 = vrot.slane %v533, %v537
    %v539 = vlaneseq
    %v540 = vshrl.u32 %v539, 7
    %v541 = vsub.s32 1, %v540
    %v542 = vrot.slane %v533, %v541
    %v543 = vlaneseq
    %v544 = vshrl.u32 %v543, 7
    %v545 = vsub.s32 2, %v544
    %v546 = vrot.slane %v533, %v545
    %v547 = vlaneseq
    %v548 = vshrl.u32 %v547, 7
    %v549 = vsub.s32 3, %v548
    %v550 = vrot.slane %v533, %v549
    %vm555 = vcmask 130048
    %v557 = vsel %vm555, %v91, 0
    %v560 = vsel %vm555, %v98, 0
    %v563 = vsel %vm555, %v105, 0
    %v566 = vsel %vm555, %v112, 0
    %v569 = vsel %vm555, %v119, 0
    %v572 = vsel %vm555, %v126, 0
    %v575 = vsel %vm555, %v133, 0
    %v578 = vsel %vm555, %v140, 0
    %580 = vmatprep.subr.mxu0 %v142
    %581 = vmatpush1.msra.mxu0 %v141
    %582 = vmatprep.subr.mxu0 %v146
    %583 = vmatpush1.msra.mxu0 %v145
    %584 = vmatprep.subr.mxu0 %v150
    %585 = vmatpush1.msra.mxu0 %v149
    %586 = vmatprep.subr.mxu0 %v154
    %587 = vmatpush1.msra.mxu0 %v153
    %588 = vmatprep.subr.mxu0 %v158
    %589 = vmatpush1.msra.mxu0 %v157
    %590 = vmatprep.subr.mxu0 %v162
    %591 = vmatpush1.msra.mxu0 %v161
    %592 = vmatprep.subr.mxu0 %v166
    %593 = vmatpush1.msra.mxu0 %v165
    %594 = vmatprep.subr.mxu0 %v170
    %595 = vmatpush1.msra.mxu0 %v169
    %596 = vmatprep.subr.mxu0 %v174
    %597 = vmatpush1.msra.mxu0 %v173
    %598 = vmatprep.subr.mxu0 %v178
    %599 = vmatpush1.msra.mxu0 %v177
    %600 = vmatprep.subr.mxu0 %v182
    %601 = vmatpush1.msra.mxu0 %v181
    %602 = vmatprep.subr.mxu0 %v186
    %603 = vmatpush1.msra.mxu0 %v185
    %604 = vmatprep.subr.mxu0 %v190
    %605 = vmatpush1.msra.mxu0 %v189
    %606 = vmatprep.subr.mxu0 %v194
    %607 = vmatpush1.msra.mxu0 %v193
    %608 = vmatprep.subr.mxu0 %v198
    %609 = vmatpush1.msra.mxu0 %v197
    %610 = vmatprep.subr.mxu0 %v202
    %611 = vmatpush1.msra.mxu0 %v201
    %612 = vmatprep.subr.mxu0 %v206
    %613 = vmatpush1.msra.mxu0 %v205
    %614 = vmatprep.subr.mxu0 %v210
    %615 = vmatpush1.msra.mxu0 %v209
    %616 = vmatprep.subr.mxu0 %v214
    %617 = vmatpush1.msra.mxu0 %v213
    %618 = vmatprep.subr.mxu0 %v218
    %619 = vmatpush1.msra.mxu0 %v217
    %620 = vmatprep.subr.mxu0 %v222
    %621 = vmatpush1.msra.mxu0 %v221
    %622 = vmatprep.subr.mxu0 %v226
    %623 = vmatpush1.msra.mxu0 %v225
    %624 = vmatprep.subr.mxu0 %v230
    %625 = vmatpush1.msra.mxu0 %v229
    %626 = vmatprep.subr.mxu0 %v234
    %627 = vmatpush1.msra.mxu0 %v233
    %628 = vmatprep.subr.mxu0 %v238
    %629 = vmatpush1.msra.mxu0 %v237
    %630 = vmatprep.subr.mxu0 %v242
    %631 = vmatpush1.msra.mxu0 %v241
    %632 = vmatprep.subr.mxu0 %v246
    %633 = vmatpush1.msra.mxu0 %v245
    %634 = vmatprep.subr.mxu0 %v250
    %635 = vmatpush1.msra.mxu0 %v249
    %636 = vmatprep.subr.mxu0 %v254
    %637 = vmatpush1.msra.mxu0 %v253
    %638 = vmatprep.subr.mxu0 %v258
    %639 = vmatpush1.msra.mxu0 %v257
    %640 = vmatprep.subr.mxu0 %v262
    %641 = vmatpush1.msra.mxu0 %v261
    %642 = vmatprep.subr.mxu0 %v266
    %643 = vmatpush1.msra.mxu0 %v265
    %644 = vmatprep.mubr.f32.mxu0 %v86
    %645 = vmatmul.mubr.f32.gmra.mrb[0].mxu0 %v85
    %v646 = vpop.f32.mrb[0].mxu0
    %v647 = vadd.f32 %v538, %v646
    %v648 = vpop.f32.mrb[0].mxu0
    %v649 = vadd.f32 %v542, %v648
    %650 = vmatprep.mubr.f32.mxu0 %v93
    %651 = vmatmul.mubr.f32.gmra.mrb[0].mxu0 %v92
    %v652 = vpop.f32.mrb[0].mxu0
    %v653 = vadd.f32 %v538, %v652
    %v654 = vpop.f32.mrb[0].mxu0
    %v655 = vadd.f32 %v542, %v654
    %656 = vmatprep.mubr.f32.mxu0 %v100
    %657 = vmatmul.mubr.f32.gmra.mrb[0].mxu0 %v99
    %v658 = vpop.f32.mrb[0].mxu0
    %v659 = vadd.f32 %v538, %v658
    %v660 = vpop.f32.mrb[0].mxu0
    %v661 = vadd.f32 %v542, %v660
    %662 = vmatprep.mubr.f32.mxu0 %v107
    %663 = vmatmul.mubr.f32.gmra.mrb[0].mxu0 %v106
    %v664 = vpop.f32.mrb[0].mxu0
    %v665 = vadd.f32 %v538, %v664
    %v666 = vpop.f32.mrb[0].mxu0
    %v667 = vadd.f32 %v542, %v666
    %668 = vmatprep.mubr.f32.mxu0 %v114
    %669 = vmatmul.mubr.f32.gmra.mrb[0].mxu0 %v113
    %v670 = vpop.f32.mrb[0].mxu0
    %v671 = vadd.f32 %v538, %v670
    %v672 = vpop.f32.mrb[0].mxu0
    %v673 = vadd.f32 %v542, %v672
    %674 = vmatprep.mubr.f32.mxu0 %v121
    %675 = vmatmul.mubr.f32.gmra.mrb[0].mxu0 %v120
    %v676 = vpop.f32.mrb[0].mxu0
    %v677 = vadd.f32 %v538, %v676
    %v678 = vpop.f32.mrb[0].mxu0
    %v679 = vadd.f32 %v542, %v678
    %680 = vmatprep.mubr.f32.mxu0 %v128
    %681 = vmatmul.mubr.f32.gmra.mrb[0].mxu0 %v127
    %v682 = vpop.f32.mrb[0].mxu0
    %v683 = vadd.f32 %v538, %v682
    %v684 = vpop.f32.mrb[0].mxu0
    %v685 = vadd.f32 %v542, %v684
    %686 = vmatprep.mubr.f32.mxu0 %v135
    %687 = vmatmul.mubr.f32.gmra.mrb[0].mxu0 %v134
    %v688 = vpop.f32.mrb[0].mxu0
    %v689 = vadd.f32 %v538, %v688
    %v690 = vpop.f32.mrb[0].mxu0
    %v691 = vadd.f32 %v542, %v690
    %692 = vdwg.mxu0
    %693 = vmatprep.subr.mxu0 %v270
    %694 = vmatpush1.msra.mxu0 %v269
    %695 = vmatprep.subr.mxu0 %v274
    %696 = vmatpush1.msra.mxu0 %v273
    %697 = vmatprep.subr.mxu0 %v278
    %698 = vmatpush1.msra.mxu0 %v277
    %699 = vmatprep.subr.mxu0 %v282
    %700 = vmatpush1.msra.mxu0 %v281
    %701 = vmatprep.subr.mxu0 %v286
    %702 = vmatpush1.msra.mxu0 %v285
    %703 = vmatprep.subr.mxu0 %v290
    %704 = vmatpush1.msra.mxu0 %v289
    %705 = vmatprep.subr.mxu0 %v294
    %706 = vmatpush1.msra.mxu0 %v293
    %707 = vmatprep.subr.mxu0 %v298
    %708 = vmatpush1.msra.mxu0 %v297
    %709 = vmatprep.subr.mxu0 %v302
    %710 = vmatpush1.msra.mxu0 %v301
    %711 = vmatprep.subr.mxu0 %v306
    %712 = vmatpush1.msra.mxu0 %v305
    %713 = vmatprep.subr.mxu0 %v310
    %714 = vmatpush1.msra.mxu0 %v309
    %715 = vmatprep.subr.mxu0 %v314
    %716 = vmatpush1.msra.mxu0 %v313
    %717 = vmatprep.subr.mxu0 %v318
    %718 = vmatpush1.msra.mxu0 %v317
    %719 = vmatprep.subr.mxu0 %v322
    %720 = vmatpush1.msra.mxu0 %v321
    %721 = vmatprep.subr.mxu0 %v326
    %722 = vmatpush1.msra.mxu0 %v325
    %723 = vmatprep.subr.mxu0 %v330
    %724 = vmatpush1.msra.mxu0 %v329
    %725 = vmatprep.subr.mxu0 %v334
    %726 = vmatpush1.msra.mxu0 %v333
    %727 = vmatprep.subr.mxu0 %v338
    %728 = vmatpush1.msra.mxu0 %v337
    %729 = vmatprep.subr.mxu0 %v342
    %730 = vmatpush1.msra.mxu0 %v341
    %731 = vmatprep.subr.mxu0 %v346
    %732 = vmatpush1.msra.mxu0 %v345
    %733 = vmatprep.subr.mxu0 %v350
    %734 = vmatpush1.msra.mxu0 %v349
    %735 = vmatprep.subr.mxu0 %v354
    %736 = vmatpush1.msra.mxu0 %v353
    %737 = vmatprep.subr.mxu0 %v358
    %738 = vmatpush1.msra.mxu0 %v357
    %739 = vmatprep.subr.mxu0 %v362
    %740 = vmatpush1.msra.mxu0 %v361
    %741 = vmatprep.subr.mxu0 %v366
    %742 = vmatpush1.msra.mxu0 %v365
    %743 = vmatprep.subr.mxu0 %v370
    %744 = vmatpush1.msra.mxu0 %v369
    %745 = vmatprep.subr.mxu0 %v374
    %746 = vmatpush1.msra.mxu0 %v373
    %747 = vmatprep.subr.mxu0 %v378
    %748 = vmatpush1.msra.mxu0 %v377
    %749 = vmatprep.subr.mxu0 %v382
    %750 = vmatpush1.msra.mxu0 %v381
    %751 = vmatprep.subr.mxu0 %v386
    %752 = vmatpush1.msra.mxu0 %v385
    %753 = vmatprep.subr.mxu0 %v390
    %754 = vmatpush1.msra.mxu0 %v389
    %755 = vmatprep.subr.mxu0 %v394
    %756 = vmatpush1.msra.mxu0 %v393
    %757 = vmatprep.mubr.f32.mxu0 %v88
    %758 = vmatmul.mubr.f32.gmra.mrb[0].mxu0 %v87
    %v759 = vpop.f32.mrb[0].mxu0
    %v760 = vadd.f32 %v647, %v759
    %v761 = vpop.f32.mrb[0].mxu0
    %v762 = vadd.f32 %v649, %v761
    %763 = vmatprep.mubr.f32.mxu0 %v95
    %764 = vmatmul.mubr.f32.gmra.mrb[0].mxu0 %v94
    %v765 = vpop.f32.mrb[0].mxu0
    %v766 = vadd.f32 %v653, %v765
    %v767 = vpop.f32.mrb[0].mxu0
    %v768 = vadd.f32 %v655, %v767
    %769 = vmatprep.mubr.f32.mxu0 %v102
    %770 = vmatmul.mubr.f32.gmra.mrb[0].mxu0 %v101
    %v771 = vpop.f32.mrb[0].mxu0
    %v772 = vadd.f32 %v659, %v771
    %v773 = vpop.f32.mrb[0].mxu0
    %v774 = vadd.f32 %v661, %v773
    %775 = vmatprep.mubr.f32.mxu0 %v109
    %776 = vmatmul.mubr.f32.gmra.mrb[0].mxu0 %v108
    %v777 = vpop.f32.mrb[0].mxu0
    %v778 = vadd.f32 %v665, %v777
    %v779 = vpop.f32.mrb[0].mxu0
    %v780 = vadd.f32 %v667, %v779
    %781 = vmatprep.mubr.f32.mxu0 %v116
    %782 = vmatmul.mubr.f32.gmra.mrb[0].mxu0 %v115
    %v783 = vpop.f32.mrb[0].mxu0
    %v784 = vadd.f32 %v671, %v783
    %v785 = vpop.f32.mrb[0].mxu0
    %v786 = vadd.f32 %v673, %v785
    %787 = vmatprep.mubr.f32.mxu0 %v123
    %788 = vmatmul.mubr.f32.gmra.mrb[0].mxu0 %v122
    %v789 = vpop.f32.mrb[0].mxu0
    %v790 = vadd.f32 %v677, %v789
    %v791 = vpop.f32.mrb[0].mxu0
    %v792 = vadd.f32 %v679, %v791
    %793 = vmatprep.mubr.f32.mxu0 %v130
    %794 = vmatmul.mubr.f32.gmra.mrb[0].mxu0 %v129
    %v795 = vpop.f32.mrb[0].mxu0
    %v796 = vadd.f32 %v683, %v795
    %v797 = vpop.f32.mrb[0].mxu0
    %v798 = vadd.f32 %v685, %v797
    %799 = vmatprep.mubr.f32.mxu0 %v137
    %800 = vmatmul.mubr.f32.gmra.mrb[0].mxu0 %v136
    %v801 = vpop.f32.mrb[0].mxu0
    %v802 = vadd.f32 %v689, %v801
    %v803 = vpop.f32.mrb[0].mxu0
    %v804 = vadd.f32 %v691, %v803
    %805 = vdwg.mxu0
    %806 = vmatprep.subr.mxu0 %v398
    %807 = vmatpush1.msra.mxu0 %v397
    %808 = vmatprep.subr.mxu0 %v402
    %809 = vmatpush1.msra.mxu0 %v401
    %810 = vmatprep.subr.mxu0 %v406
    %811 = vmatpush1.msra.mxu0 %v405
    %812 = vmatprep.subr.mxu0 %v410
    %813 = vmatpush1.msra.mxu0 %v409
    %814 = vmatprep.subr.mxu0 %v414
    %815 = vmatpush1.msra.mxu0 %v413
    %816 = vmatprep.subr.mxu0 %v418
    %817 = vmatpush1.msra.mxu0 %v417
    %818 = vmatprep.subr.mxu0 %v422
    %819 = vmatpush1.msra.mxu0 %v421
    %820 = vmatprep.subr.mxu0 %v426
    %821 = vmatpush1.msra.mxu0 %v425
    %822 = vmatprep.subr.mxu0 %v430
    %823 = vmatpush1.msra.mxu0 %v429
    %824 = vmatprep.subr.mxu0 %v434
    %825 = vmatpush1.msra.mxu0 %v433
    %826 = vmatprep.subr.mxu0 %v438
    %827 = vmatpush1.msra.mxu0 %v437
    %828 = vmatprep.subr.mxu0 %v442
    %829 = vmatpush1.msra.mxu0 %v441
    %830 = vmatprep.subr.mxu0 %v446
    %831 = vmatpush1.msra.mxu0 %v445
    %832 = vmatprep.subr.mxu0 %v450
    %833 = vmatpush1.msra.mxu0 %v449
    %834 = vmatprep.subr.mxu0 %v454
    %835 = vmatpush1.msra.mxu0 %v453
    %836 = vmatprep.subr.mxu0 %v458
    %837 = vmatpush1.msra.mxu0 %v457
    %838 = vmatprep.subr.mxu0 %v462
    %839 = vmatpush1.msra.mxu0 %v461
    %840 = vmatprep.subr.mxu0 %v466
    %841 = vmatpush1.msra.mxu0 %v465
    %842 = vmatprep.subr.mxu0 %v470
    %843 = vmatpush1.msra.mxu0 %v469
    %844 = vmatprep.subr.mxu0 %v474
    %845 = vmatpush1.msra.mxu0 %v473
    %846 = vmatprep.subr.mxu0 %v478
    %847 = vmatpush1.msra.mxu0 %v477
    %848 = vmatprep.subr.mxu0 %v482
    %849 = vmatpush1.msra.mxu0 %v481
    %850 = vmatprep.subr.mxu0 %v486
    %851 = vmatpush1.msra.mxu0 %v485
    %852 = vmatprep.subr.mxu0 %v490
    %853 = vmatpush1.msra.mxu0 %v489
    %854 = vmatprep.subr.mxu0 %v494
    %855 = vmatpush1.msra.mxu0 %v493
    %856 = vmatprep.subr.mxu0 %v498
    %857 = vmatpush1.msra.mxu0 %v497
    %858 = vmatprep.subr.mxu0 %v502
    %859 = vmatpush1.msra.mxu0 %v501
    %860 = vmatprep.subr.mxu0 %v506
    %861 = vmatpush1.msra.mxu0 %v505
    %862 = vmatprep.subr.mxu0 %v510
    %863 = vmatpush1.msra.mxu0 %v509
    %864 = vmatprep.subr.mxu0 %v514
    %865 = vmatpush1.msra.mxu0 %v513
    %866 = vmatprep.subr.mxu0 %v518
    %867 = vmatpush1.msra.mxu0 %v517
    %868 = vmatprep.subr.mxu0 %v522
    %869 = vmatpush1.msra.mxu0 %v521
    %870 = vmatprep.mubr.f32.mxu0 %v90
    %871 = vmatmul.mubr.f32.gmra.mrb[0].mxu0 %v89
    %v872 = vpop.f32.mrb[0].mxu0
    %v873 = vadd.f32 %v760, %v872
    %v874 = vpop.f32.mrb[0].mxu0
    %v875 = vadd.f32 %v762, %v874
    %876 = vmatprep.mubr.f32.mxu0 %v97
    %877 = vmatmul.mubr.f32.gmra.mrb[0].mxu0 %v96
    %v878 = vpop.f32.mrb[0].mxu0
    %v879 = vadd.f32 %v766, %v878
    %v880 = vpop.f32.mrb[0].mxu0
    %v881 = vadd.f32 %v768, %v880
    %882 = vmatprep.mubr.f32.mxu0 %v104
    %883 = vmatmul.mubr.f32.gmra.mrb[0].mxu0 %v103
    %v884 = vpop.f32.mrb[0].mxu0
    %v885 = vadd.f32 %v772, %v884
    %v886 = vpop.f32.mrb[0].mxu0
    %v887 = vadd.f32 %v774, %v886
    %888 = vmatprep.mubr.f32.mxu0 %v111
    %889 = vmatmul.mubr.f32.gmra.mrb[0].mxu0 %v110
    %v890 = vpop.f32.mrb[0].mxu0
    %v891 = vadd.f32 %v778, %v890
    %v892 = vpop.f32.mrb[0].mxu0
    %v893 = vadd.f32 %v780, %v892
    %894 = vmatprep.mubr.f32.mxu0 %v118
    %895 = vmatmul.mubr.f32.gmra.mrb[0].mxu0 %v117
    %v896 = vpop.f32.mrb[0].mxu0
    %v897 = vadd.f32 %v784, %v896
    %v898 = vpop.f32.mrb[0].mxu0
    %v899 = vadd.f32 %v786, %v898
    %900 = vmatprep.mubr.f32.mxu0 %v125
    %901 = vmatmul.mubr.f32.gmra.mrb[0].mxu0 %v124
    %v902 = vpop.f32.mrb[0].mxu0
    %v903 = vadd.f32 %v790, %v902
    %v904 = vpop.f32.mrb[0].mxu0
    %v905 = vadd.f32 %v792, %v904
    %906 = vmatprep.mubr.f32.mxu0 %v132
    %907 = vmatmul.mubr.f32.gmra.mrb[0].mxu0 %v131
    %v908 = vpop.f32.mrb[0].mxu0
    %v909 = vadd.f32 %v796, %v908
    %v910 = vpop.f32.mrb[0].mxu0
    %v911 = vadd.f32 %v798, %v910
    %912 = vmatprep.mubr.f32.mxu0 %v139
    %913 = vmatmul.mubr.f32.gmra.mrb[0].mxu0 %v138
    %v914 = vpop.f32.mrb[0].mxu0
    %v915 = vadd.f32 %v802, %v914
    %v916 = vpop.f32.mrb[0].mxu0
    %v917 = vadd.f32 %v804, %v916
    %918 = vdwg.mxu0
    %919 = vmatprep.subr.mxu0 %v526
    %920 = vmatpush1.msra.mxu0 %v525
    %921 = vmatprep.subr.mxu0 %v530
    %922 = vmatpush1.msra.mxu0 %v529
    %923 = vmatprep.subr.mxu0 0.0
    %924 = vmatpush1.msra.mxu0 0.0
    %925 = vmatprep.subr.mxu0 0.0
    %926 = vmatpush1.msra.mxu0 0.0
    %927 = vmatprep.subr.mxu0 0.0
    %928 = vmatpush1.msra.mxu0 0.0
    %929 = vmatprep.subr.mxu0 0.0
    %930 = vmatpush1.msra.mxu0 0.0
    %931 = vmatprep.subr.mxu0 0.0
    %932 = vmatpush1.msra.mxu0 0.0
    %933 = vmatprep.subr.mxu0 0.0
    %934 = vmatpush1.msra.mxu0 0.0
    %935 = vmatprep.subr.mxu0 0.0
    %936 = vmatpush1.msra.mxu0 0.0
    %937 = vmatprep.subr.mxu0 0.0
    %938 = vmatpush1.msra.mxu0 0.0
    %939 = vmatprep.subr.mxu0 0.0
    %940 = vmatpush1.msra.mxu0 0.0
    %941 = vmatprep.subr.mxu0 0.0
    %942 = vmatpush1.msra.mxu0 0.0
    %943 = vmatprep.subr.mxu0 0.0
    %944 = vmatpush1.msra.mxu0 0.0
    %945 = vmatprep.subr.mxu0 0.0
    %946 = vmatpush1.msra.mxu0 0.0
    %947 = vmatprep.subr.mxu0 0.0
    %948 = vmatpush1.msra.mxu0 0.0
    %949 = vmatprep.subr.mxu0 0.0
    %950 = vmatpush1.msra.mxu0 0.0
    %951 = vmatprep.subr.mxu0 0.0
    %952 = vmatpush1.msra.mxu0 0.0
    %953 = vmatprep.subr.mxu0 0.0
    %954 = vmatpush1.msra.mxu0 0.0
    %955 = vmatprep.subr.mxu0 0.0
    %956 = vmatpush1.msra.mxu0 0.0
    %957 = vmatprep.subr.mxu0 0.0
    %958 = vmatpush1.msra.mxu0 0.0
    %959 = vmatprep.subr.mxu0 0.0
    %960 = vmatpush1.msra.mxu0 0.0
    %961 = vmatprep.subr.mxu0 0.0
    %962 = vmatpush1.msra.mxu0 0.0
    %963 = vmatprep.subr.mxu0 0.0
    %964 = vmatpush1.msra.mxu0 0.0
    %965 = vmatprep.subr.mxu0 0.0
    %966 = vmatpush1.msra.mxu0 0.0
    %967 = vmatprep.subr.mxu0 0.0
    %968 = vmatpush1.msra.mxu0 0.0
    %969 = vmatprep.subr.mxu0 0.0
    %970 = vmatpush1.msra.mxu0 0.0
    %971 = vmatprep.subr.mxu0 0.0
    %972 = vmatpush1.msra.mxu0 0.0
    %973 = vmatprep.subr.mxu0 0.0
    %974 = vmatpush1.msra.mxu0 0.0
    %975 = vmatprep.subr.mxu0 0.0
    %976 = vmatpush1.msra.mxu0 0.0
    %977 = vmatprep.subr.mxu0 0.0
    %978 = vmatpush1.msra.mxu0 0.0
    %979 = vmatprep.subr.mxu0 0.0
    %980 = vmatpush1.msra.mxu0 0.0
    %981 = vmatprep.subr.mxu0 0.0
    %982 = vmatpush1.msra.mxu0 0.0
    %983 = vmatprep.mubr.f32.mxu0 0.0
    %984 = vmatmul.mubr.f32.gmra.mrb[0].mxu0 %v557
    %v985 = vpop.f32.mrb[0].mxu0
    %v986 = vadd.f32 %v873, %v985
    %v987 = vpop.f32.mrb[0].mxu0
    %v988 = vadd.f32 %v875, %v987
    %989 = vmatprep.mubr.f32.mxu0 0.0
    %990 = vmatmul.mubr.f32.gmra.mrb[0].mxu0 %v560
    %v991 = vpop.f32.mrb[0].mxu0
    %v992 = vadd.f32 %v879, %v991
    %v993 = vpop.f32.mrb[0].mxu0
    %v994 = vadd.f32 %v881, %v993
    %995 = vmatprep.mubr.f32.mxu0 0.0
    %996 = vmatmul.mubr.f32.gmra.mrb[0].mxu0 %v563
    %v997 = vpop.f32.mrb[0].mxu0
    %v998 = vadd.f32 %v885, %v997
    %v999 = vpop.f32.mrb[0].mxu0
    %v1000 = vadd.f32 %v887, %v999
    %1001 = vmatprep.mubr.f32.mxu0 0.0
    %1002 = vmatmul.mubr.f32.gmra.mrb[0].mxu0 %v566
    %v1003 = vpop.f32.mrb[0].mxu0
    %v1004 = vadd.f32 %v891, %v1003
    %v1005 = vpop.f32.mrb[0].mxu0
    %v1006 = vadd.f32 %v893, %v1005
    %1007 = vmatprep.mubr.f32.mxu0 0.0
    %1008 = vmatmul.mubr.f32.gmra.mrb[0].mxu0 %v569
    %v1009 = vpop.f32.mrb[0].mxu0
    %v1010 = vadd.f32 %v897, %v1009
    %v1011 = vpop.f32.mrb[0].mxu0
    %v1012 = vadd.f32 %v899, %v1011
    %1013 = vmatprep.mubr.f32.mxu0 0.0
    %1014 = vmatmul.mubr.f32.gmra.mrb[0].mxu0 %v572
    %v1015 = vpop.f32.mrb[0].mxu0
    %v1016 = vadd.f32 %v903, %v1015
    %v1017 = vpop.f32.mrb[0].mxu0
    %v1018 = vadd.f32 %v905, %v1017
    %1019 = vmatprep.mubr.f32.mxu0 0.0
    %1020 = vmatmul.mubr.f32.gmra.mrb[0].mxu0 %v575
    %v1021 = vpop.f32.mrb[0].mxu0
    %v1022 = vadd.f32 %v909, %v1021
    %v1023 = vpop.f32.mrb[0].mxu0
    %v1024 = vadd.f32 %v911, %v1023
    %1025 = vmatprep.mubr.f32.mxu0 0.0
    %1026 = vmatmul.mubr.f32.gmra.mrb[0].mxu0 %v578
    %v1027 = vpop.f32.mrb[0].mxu0
    %v1028 = vadd.f32 %v915, %v1027
    %v1029 = vpop.f32.mrb[0].mxu0
    %v1030 = vadd.f32 %v917, %v1029
    %1031 = vdwg.mxu0
    %1032 = vmatprep.subr.mxu0 %v144
    %1033 = vmatpush1.msra.mxu0 %v143
    %1034 = vmatprep.subr.mxu0 %v148
    %1035 = vmatpush1.msra.mxu0 %v147
    %1036 = vmatprep.subr.mxu0 %v152
    %1037 = vmatpush1.msra.mxu0 %v151
    %1038 = vmatprep.subr.mxu0 %v156
    %1039 = vmatpush1.msra.mxu0 %v155
    %1040 = vmatprep.subr.mxu0 %v160
    %1041 = vmatpush1.msra.mxu0 %v159
    %1042 = vmatprep.subr.mxu0 %v164
    %1043 = vmatpush1.msra.mxu0 %v163
    %1044 = vmatprep.subr.mxu0 %v168
    %1045 = vmatpush1.msra.mxu0 %v167
    %1046 = vmatprep.subr.mxu0 %v172
    %1047 = vmatpush1.msra.mxu0 %v171
    %1048 = vmatprep.subr.mxu0 %v176
    %1049 = vmatpush1.msra.mxu0 %v175
    %1050 = vmatprep.subr.mxu0 %v180
    %1051 = vmatpush1.msra.mxu0 %v179
    %1052 = vmatprep.subr.mxu0 %v184
    %1053 = vmatpush1.msra.mxu0 %v183
    %1054 = vmatprep.subr.mxu0 %v188
    %1055 = vmatpush1.msra.mxu0 %v187
    %1056 = vmatprep.subr.mxu0 %v192
    %1057 = vmatpush1.msra.mxu0 %v191
    %1058 = vmatprep.subr.mxu0 %v196
    %1059 = vmatpush1.msra.mxu0 %v195
    %1060 = vmatprep.subr.mxu0 %v200
    %1061 = vmatpush1.msra.mxu0 %v199
    %1062 = vmatprep.subr.mxu0 %v204
    %1063 = vmatpush1.msra.mxu0 %v203
    %1064 = vmatprep.subr.mxu0 %v208
    %1065 = vmatpush1.msra.mxu0 %v207
    %1066 = vmatprep.subr.mxu0 %v212
    %1067 = vmatpush1.msra.mxu0 %v211
    %1068 = vmatprep.subr.mxu0 %v216
    %1069 = vmatpush1.msra.mxu0 %v215
    %1070 = vmatprep.subr.mxu0 %v220
    %1071 = vmatpush1.msra.mxu0 %v219
    %1072 = vmatprep.subr.mxu0 %v224
    %1073 = vmatpush1.msra.mxu0 %v223
    %1074 = vmatprep.subr.mxu0 %v228
    %1075 = vmatpush1.msra.mxu0 %v227
    %1076 = vmatprep.subr.mxu0 %v232
    %1077 = vmatpush1.msra.mxu0 %v231
    %1078 = vmatprep.subr.mxu0 %v236
    %1079 = vmatpush1.msra.mxu0 %v235
    %1080 = vmatprep.subr.mxu0 %v240
    %1081 = vmatpush1.msra.mxu0 %v239
    %1082 = vmatprep.subr.mxu0 %v244
    %1083 = vmatpush1.msra.mxu0 %v243
    %1084 = vmatprep.subr.mxu0 %v248
    %1085 = vmatpush1.msra.mxu0 %v247
    %1086 = vmatprep.subr.mxu0 %v252
    %1087 = vmatpush1.msra.mxu0 %v251
    %1088 = vmatprep.subr.mxu0 %v256
    %1089 = vmatpush1.msra.mxu0 %v255
    %1090 = vmatprep.subr.mxu0 %v260
    %1091 = vmatpush1.msra.mxu0 %v259
    %1092 = vmatprep.subr.mxu0 %v264
    %1093 = vmatpush1.msra.mxu0 %v263
    %1094 = vmatprep.subr.mxu0 %v268
    %1095 = vmatpush1.msra.mxu0 %v267
    %1096 = vmatprep.mubr.f32.mxu0 %v86
    %1097 = vmatmul.mubr.f32.gmra.mrb[0].mxu0 %v85
    %v1098 = vpop.f32.mrb[0].mxu0
    %v1099 = vadd.f32 %v546, %v1098
    %v1100 = vpop.f32.mrb[0].mxu0
    %v1101 = vadd.f32 %v550, %v1100
    %1102 = vmatprep.mubr.f32.mxu0 %v93
    %1103 = vmatmul.mubr.f32.gmra.mrb[0].mxu0 %v92
    %v1104 = vpop.f32.mrb[0].mxu0
    %v1105 = vadd.f32 %v546, %v1104
    %v1106 = vpop.f32.mrb[0].mxu0
    %v1107 = vadd.f32 %v550, %v1106
    %1108 = vmatprep.mubr.f32.mxu0 %v100
    %1109 = vmatmul.mubr.f32.gmra.mrb[0].mxu0 %v99
    %v1110 = vpop.f32.mrb[0].mxu0
    %v1111 = vadd.f32 %v546, %v1110
    %v1112 = vpop.f32.mrb[0].mxu0
    %v1113 = vadd.f32 %v550, %v1112
    %1114 = vmatprep.mubr.f32.mxu0 %v107
    %1115 = vmatmul.mubr.f32.gmra.mrb[0].mxu0 %v106
    %v1116 = vpop.f32.mrb[0].mxu0
    %v1117 = vadd.f32 %v546, %v1116
    %v1118 = vpop.f32.mrb[0].mxu0
    %v1119 = vadd.f32 %v550, %v1118
    %1120 = vmatprep.mubr.f32.mxu0 %v114
    %1121 = vmatmul.mubr.f32.gmra.mrb[0].mxu0 %v113
    %v1122 = vpop.f32.mrb[0].mxu0
    %v1123 = vadd.f32 %v546, %v1122
    %v1124 = vpop.f32.mrb[0].mxu0
    %v1125 = vadd.f32 %v550, %v1124
    %1126 = vmatprep.mubr.f32.mxu0 %v121
    %1127 = vmatmul.mubr.f32.gmra.mrb[0].mxu0 %v120
    %v1128 = vpop.f32.mrb[0].mxu0
    %v1129 = vadd.f32 %v546, %v1128
    %v1130 = vpop.f32.mrb[0].mxu0
    %v1131 = vadd.f32 %v550, %v1130
    %1132 = vmatprep.mubr.f32.mxu0 %v128
    %1133 = vmatmul.mubr.f32.gmra.mrb[0].mxu0 %v127
    %v1134 = vpop.f32.mrb[0].mxu0
    %v1135 = vadd.f32 %v546, %v1134
    %v1136 = vpop.f32.mrb[0].mxu0
    %v1137 = vadd.f32 %v550, %v1136
    %1138 = vmatprep.mubr.f32.mxu0 %v135
    %1139 = vmatmul.mubr.f32.gmra.mrb[0].mxu0 %v134
    %v1140 = vpop.f32.mrb[0].mxu0
    %v1141 = vadd.f32 %v546, %v1140
    %v1142 = vpop.f32.mrb[0].mxu0
    %v1143 = vadd.f32 %v550, %v1142
    %1144 = vdwg.mxu0
    %1145 = vmatprep.subr.mxu0 %v272
    %1146 = vmatpush1.msra.mxu0 %v271
    %1147 = vmatprep.subr.mxu0 %v276
    %1148 = vmatpush1.msra.mxu0 %v275
    %1149 = vmatprep.subr.mxu0 %v280
    %1150 = vmatpush1.msra.mxu0 %v279
    %1151 = vmatprep.subr.mxu0 %v284
    %1152 = vmatpush1.msra.mxu0 %v283
    %1153 = vmatprep.subr.mxu0 %v288
    %1154 = vmatpush1.msra.mxu0 %v287
    %1155 = vmatprep.subr.mxu0 %v292
    %1156 = vmatpush1.msra.mxu0 %v291
    %1157 = vmatprep.subr.mxu0 %v296
    %1158 = vmatpush1.msra.mxu0 %v295
    %1159 = vmatprep.subr.mxu0 %v300
    %1160 = vmatpush1.msra.mxu0 %v299
    %1161 = vmatprep.subr.mxu0 %v304
    %1162 = vmatpush1.msra.mxu0 %v303
    %1163 = vmatprep.subr.mxu0 %v308
    %1164 = vmatpush1.msra.mxu0 %v307
    %1165 = vmatprep.subr.mxu0 %v312
    %1166 = vmatpush1.msra.mxu0 %v311
    %1167 = vmatprep.subr.mxu0 %v316
    %1168 = vmatpush1.msra.mxu0 %v315
    %1169 = vmatprep.subr.mxu0 %v320
    %1170 = vmatpush1.msra.mxu0 %v319
    %1171 = vmatprep.subr.mxu0 %v324
    %1172 = vmatpush1.msra.mxu0 %v323
    %1173 = vmatprep.subr.mxu0 %v328
    %1174 = vmatpush1.msra.mxu0 %v327
    %1175 = vmatprep.subr.mxu0 %v332
    %1176 = vmatpush1.msra.mxu0 %v331
    %1177 = vmatprep.subr.mxu0 %v336
    %1178 = vmatpush1.msra.mxu0 %v335
    %1179 = vmatprep.subr.mxu0 %v340
    %1180 = vmatpush1.msra.mxu0 %v339
    %1181 = vmatprep.subr.mxu0 %v344
    %1182 = vmatpush1.msra.mxu0 %v343
    %1183 = vmatprep.subr.mxu0 %v348
    %1184 = vmatpush1.msra.mxu0 %v347
    %1185 = vmatprep.subr.mxu0 %v352
    %1186 = vmatpush1.msra.mxu0 %v351
    %1187 = vmatprep.subr.mxu0 %v356
    %1188 = vmatpush1.msra.mxu0 %v355
    %1189 = vmatprep.subr.mxu0 %v360
    %1190 = vmatpush1.msra.mxu0 %v359
    %1191 = vmatprep.subr.mxu0 %v364
    %1192 = vmatpush1.msra.mxu0 %v363
    %1193 = vmatprep.subr.mxu0 %v368
    %1194 = vmatpush1.msra.mxu0 %v367
    %1195 = vmatprep.subr.mxu0 %v372
    %1196 = vmatpush1.msra.mxu0 %v371
    %1197 = vmatprep.subr.mxu0 %v376
    %1198 = vmatpush1.msra.mxu0 %v375
    %1199 = vmatprep.subr.mxu0 %v380
    %1200 = vmatpush1.msra.mxu0 %v379
    %1201 = vmatprep.subr.mxu0 %v384
    %1202 = vmatpush1.msra.mxu0 %v383
    %1203 = vmatprep.subr.mxu0 %v388
    %1204 = vmatpush1.msra.mxu0 %v387
    %1205 = vmatprep.subr.mxu0 %v392
    %1206 = vmatpush1.msra.mxu0 %v391
    %1207 = vmatprep.subr.mxu0 %v396
    %1208 = vmatpush1.msra.mxu0 %v395
    %1209 = vmatprep.mubr.f32.mxu0 %v88
    %1210 = vmatmul.mubr.f32.gmra.mrb[0].mxu0 %v87
    %v1211 = vpop.f32.mrb[0].mxu0
    %v1212 = vadd.f32 %v1099, %v1211
    %v1213 = vpop.f32.mrb[0].mxu0
    %v1214 = vadd.f32 %v1101, %v1213
    %1215 = vmatprep.mubr.f32.mxu0 %v95
    %1216 = vmatmul.mubr.f32.gmra.mrb[0].mxu0 %v94
    %v1217 = vpop.f32.mrb[0].mxu0
    %v1218 = vadd.f32 %v1105, %v1217
    %v1219 = vpop.f32.mrb[0].mxu0
    %v1220 = vadd.f32 %v1107, %v1219
    %1221 = vmatprep.mubr.f32.mxu0 %v102
    %1222 = vmatmul.mubr.f32.gmra.mrb[0].mxu0 %v101
    %v1223 = vpop.f32.mrb[0].mxu0
    %v1224 = vadd.f32 %v1111, %v1223
    %v1225 = vpop.f32.mrb[0].mxu0
    %v1226 = vadd.f32 %v1113, %v1225
    %1227 = vmatprep.mubr.f32.mxu0 %v109
    %1228 = vmatmul.mubr.f32.gmra.mrb[0].mxu0 %v108
    %v1229 = vpop.f32.mrb[0].mxu0
    %v1230 = vadd.f32 %v1117, %v1229
    %v1231 = vpop.f32.mrb[0].mxu0
    %v1232 = vadd.f32 %v1119, %v1231
    %1233 = vmatprep.mubr.f32.mxu0 %v116
    %1234 = vmatmul.mubr.f32.gmra.mrb[0].mxu0 %v115
    %v1235 = vpop.f32.mrb[0].mxu0
    %v1236 = vadd.f32 %v1123, %v1235
    %v1237 = vpop.f32.mrb[0].mxu0
    %v1238 = vadd.f32 %v1125, %v1237
    %1239 = vmatprep.mubr.f32.mxu0 %v123
    %1240 = vmatmul.mubr.f32.gmra.mrb[0].mxu0 %v122
    %v1241 = vpop.f32.mrb[0].mxu0
    %v1242 = vadd.f32 %v1129, %v1241
    %v1243 = vpop.f32.mrb[0].mxu0
    %v1244 = vadd.f32 %v1131, %v1243
    %1245 = vmatprep.mubr.f32.mxu0 %v130
    %1246 = vmatmul.mubr.f32.gmra.mrb[0].mxu0 %v129
    %v1247 = vpop.f32.mrb[0].mxu0
    %v1248 = vadd.f32 %v1135, %v1247
    %v1249 = vpop.f32.mrb[0].mxu0
    %v1250 = vadd.f32 %v1137, %v1249
    %1251 = vmatprep.mubr.f32.mxu0 %v137
    %1252 = vmatmul.mubr.f32.gmra.mrb[0].mxu0 %v136
    %v1253 = vpop.f32.mrb[0].mxu0
    %v1254 = vadd.f32 %v1141, %v1253
    %v1255 = vpop.f32.mrb[0].mxu0
    %v1256 = vadd.f32 %v1143, %v1255
    %1257 = vdwg.mxu0
    %1258 = vmatprep.subr.mxu0 %v400
    %1259 = vmatpush1.msra.mxu0 %v399
    %1260 = vmatprep.subr.mxu0 %v404
    %1261 = vmatpush1.msra.mxu0 %v403
    %1262 = vmatprep.subr.mxu0 %v408
    %1263 = vmatpush1.msra.mxu0 %v407
    %1264 = vmatprep.subr.mxu0 %v412
    %1265 = vmatpush1.msra.mxu0 %v411
    %1266 = vmatprep.subr.mxu0 %v416
    %1267 = vmatpush1.msra.mxu0 %v415
    %1268 = vmatprep.subr.mxu0 %v420
    %1269 = vmatpush1.msra.mxu0 %v419
    %1270 = vmatprep.subr.mxu0 %v424
    %1271 = vmatpush1.msra.mxu0 %v423
    %1272 = vmatprep.subr.mxu0 %v428
    %1273 = vmatpush1.msra.mxu0 %v427
    %1274 = vmatprep.subr.mxu0 %v432
    %1275 = vmatpush1.msra.mxu0 %v431
    %1276 = vmatprep.subr.mxu0 %v436
    %1277 = vmatpush1.msra.mxu0 %v435
    %1278 = vmatprep.subr.mxu0 %v440
    %1279 = vmatpush1.msra.mxu0 %v439
    %1280 = vmatprep.subr.mxu0 %v444
    %1281 = vmatpush1.msra.mxu0 %v443
    %1282 = vmatprep.subr.mxu0 %v448
    %1283 = vmatpush1.msra.mxu0 %v447
    %1284 = vmatprep.subr.mxu0 %v452
    %1285 = vmatpush1.msra.mxu0 %v451
    %1286 = vmatprep.subr.mxu0 %v456
    %1287 = vmatpush1.msra.mxu0 %v455
    %1288 = vmatprep.subr.mxu0 %v460
    %1289 = vmatpush1.msra.mxu0 %v459
    %1290 = vmatprep.subr.mxu0 %v464
    %1291 = vmatpush1.msra.mxu0 %v463
    %1292 = vmatprep.subr.mxu0 %v468
    %1293 = vmatpush1.msra.mxu0 %v467
    %1294 = vmatprep.subr.mxu0 %v472
    %1295 = vmatpush1.msra.mxu0 %v471
    %1296 = vmatprep.subr.mxu0 %v476
    %1297 = vmatpush1.msra.mxu0 %v475
    %1298 = vmatprep.subr.mxu0 %v480
    %1299 = vmatpush1.msra.mxu0 %v479
    %1300 = vmatprep.subr.mxu0 %v484
    %1301 = vmatpush1.msra.mxu0 %v483
    %1302 = vmatprep.subr.mxu0 %v488
    %1303 = vmatpush1.msra.mxu0 %v487
    %1304 = vmatprep.subr.mxu0 %v492
    %1305 = vmatpush1.msra.mxu0 %v491
    %1306 = vmatprep.subr.mxu0 %v496
    %1307 = vmatpush1.msra.mxu0 %v495
    %1308 = vmatprep.subr.mxu0 %v500
    %1309 = vmatpush1.msra.mxu0 %v499
    %1310 = vmatprep.subr.mxu0 %v504
    %1311 = vmatpush1.msra.mxu0 %v503
    %1312 = vmatprep.subr.mxu0 %v508
    %1313 = vmatpush1.msra.mxu0 %v507
    %1314 = vmatprep.subr.mxu0 %v512
    %1315 = vmatpush1.msra.mxu0 %v511
    %1316 = vmatprep.subr.mxu0 %v516
    %1317 = vmatpush1.msra.mxu0 %v515
    %1318 = vmatprep.subr.mxu0 %v520
    %1319 = vmatpush1.msra.mxu0 %v519
    %1320 = vmatprep.subr.mxu0 %v524
    %1321 = vmatpush1.msra.mxu0 %v523
    %1322 = vmatprep.mubr.f32.mxu0 %v90
    %1323 = vmatmul.mubr.f32.gmra.mrb[0].mxu0 %v89
    %v1324 = vpop.f32.mrb[0].mxu0
    %v1325 = vadd.f32 %v1212, %v1324
    %v1326 = vpop.f32.mrb[0].mxu0
    %v1327 = vadd.f32 %v1214, %v1326
    %1328 = vmatprep.mubr.f32.mxu0 %v97
    %1329 = vmatmul.mubr.f32.gmra.mrb[0].mxu0 %v96
    %v1330 = vpop.f32.mrb[0].mxu0
    %v1331 = vadd.f32 %v1218, %v1330
    %v1332 = vpop.f32.mrb[0].mxu0
    %v1333 = vadd.f32 %v1220, %v1332
    %1334 = vmatprep.mubr.f32.mxu0 %v104
    %1335 = vmatmul.mubr.f32.gmra.mrb[0].mxu0 %v103
    %v1336 = vpop.f32.mrb[0].mxu0
    %v1337 = vadd.f32 %v1224, %v1336
    %v1338 = vpop.f32.mrb[0].mxu0
    %v1339 = vadd.f32 %v1226, %v1338
    %1340 = vmatprep.mubr.f32.mxu0 %v111
    %1341 = vmatmul.mubr.f32.gmra.mrb[0].mxu0 %v110
    %v1342 = vpop.f32.mrb[0].mxu0
    %v1343 = vadd.f32 %v1230, %v1342
    %v1344 = vpop.f32.mrb[0].mxu0
    %v1345 = vadd.f32 %v1232, %v1344
    %1346 = vmatprep.mubr.f32.mxu0 %v118
    %1347 = vmatmul.mubr.f32.gmra.mrb[0].mxu0 %v117
    %v1348 = vpop.f32.mrb[0].mxu0
    %v1349 = vadd.f32 %v1236, %v1348
    %v1350 = vpop.f32.mrb[0].mxu0
    %v1351 = vadd.f32 %v1238, %v1350
    %1352 = vmatprep.mubr.f32.mxu0 %v125
    %1353 = vmatmul.mubr.f32.gmra.mrb[0].mxu0 %v124
    %v1354 = vpop.f32.mrb[0].mxu0
    %v1355 = vadd.f32 %v1242, %v1354
    %v1356 = vpop.f32.mrb[0].mxu0
    %v1357 = vadd.f32 %v1244, %v1356
    %1358 = vmatprep.mubr.f32.mxu0 %v132
    %1359 = vmatmul.mubr.f32.gmra.mrb[0].mxu0 %v131
    %v1360 = vpop.f32.mrb[0].mxu0
    %v1361 = vadd.f32 %v1248, %v1360
    %v1362 = vpop.f32.mrb[0].mxu0
    %v1363 = vadd.f32 %v1250, %v1362
    %1364 = vmatprep.mubr.f32.mxu0 %v139
    %1365 = vmatmul.mubr.f32.gmra.mrb[0].mxu0 %v138
    %v1366 = vpop.f32.mrb[0].mxu0
    %v1367 = vadd.f32 %v1254, %v1366
    %v1368 = vpop.f32.mrb[0].mxu0
    %v1369 = vadd.f32 %v1256, %v1368
    %1370 = vdwg.mxu0
    %1371 = vmatprep.subr.mxu0 %v528
    %1372 = vmatpush1.msra.mxu0 %v527
    %1373 = vmatprep.subr.mxu0 %v532
    %1374 = vmatpush1.msra.mxu0 %v531
    %1375 = vmatprep.subr.mxu0 0.0
    %1376 = vmatpush1.msra.mxu0 0.0
    %1377 = vmatprep.subr.mxu0 0.0
    %1378 = vmatpush1.msra.mxu0 0.0
    %1379 = vmatprep.subr.mxu0 0.0
    %1380 = vmatpush1.msra.mxu0 0.0
    %1381 = vmatprep.subr.mxu0 0.0
    %1382 = vmatpush1.msra.mxu0 0.0
    %1383 = vmatprep.subr.mxu0 0.0
    %1384 = vmatpush1.msra.mxu0 0.0
    %1385 = vmatprep.subr.mxu0 0.0
    %1386 = vmatpush1.msra.mxu0 0.0
    %1387 = vmatprep.subr.mxu0 0.0
    %1388 = vmatpush1.msra.mxu0 0.0
    %1389 = vmatprep.subr.mxu0 0.0
    %1390 = vmatpush1.msra.mxu0 0.0
    %1391 = vmatprep.subr.mxu0 0.0
    %1392 = vmatpush1.msra.mxu0 0.0
    %1393 = vmatprep.subr.mxu0 0.0
    %1394 = vmatpush1.msra.mxu0 0.0
    %1395 = vmatprep.subr.mxu0 0.0
    %1396 = vmatpush1.msra.mxu0 0.0
    %1397 = vmatprep.subr.mxu0 0.0
    %1398 = vmatpush1.msra.mxu0 0.0
    %1399 = vmatprep.subr.mxu0 0.0
    %1400 = vmatpush1.msra.mxu0 0.0
    %1401 = vmatprep.subr.mxu0 0.0
    %1402 = vmatpush1.msra.mxu0 0.0
    %1403 = vmatprep.subr.mxu0 0.0
    %1404 = vmatpush1.msra.mxu0 0.0
    %1405 = vmatprep.subr.mxu0 0.0
    %1406 = vmatpush1.msra.mxu0 0.0
    %1407 = vmatprep.subr.mxu0 0.0
    %1408 = vmatpush1.msra.mxu0 0.0
    %1409 = vmatprep.subr.mxu0 0.0
    %1410 = vmatpush1.msra.mxu0 0.0
    %1411 = vmatprep.subr.mxu0 0.0
    %1412 = vmatpush1.msra.mxu0 0.0
    %1413 = vmatprep.subr.mxu0 0.0
    %1414 = vmatpush1.msra.mxu0 0.0
    %1415 = vmatprep.subr.mxu0 0.0
    %1416 = vmatpush1.msra.mxu0 0.0
    %1417 = vmatprep.subr.mxu0 0.0
    %1418 = vmatpush1.msra.mxu0 0.0
    %1419 = vmatprep.subr.mxu0 0.0
    %1420 = vmatpush1.msra.mxu0 0.0
    %1421 = vmatprep.subr.mxu0 0.0
    %1422 = vmatpush1.msra.mxu0 0.0
    %1423 = vmatprep.subr.mxu0 0.0
    %1424 = vmatpush1.msra.mxu0 0.0
    %1425 = vmatprep.subr.mxu0 0.0
    %1426 = vmatpush1.msra.mxu0 0.0
    %1427 = vmatprep.subr.mxu0 0.0
    %1428 = vmatpush1.msra.mxu0 0.0
    %1429 = vmatprep.subr.mxu0 0.0
    %1430 = vmatpush1.msra.mxu0 0.0
    %1431 = vmatprep.subr.mxu0 0.0
    %1432 = vmatpush1.msra.mxu0 0.0
    %1433 = vmatprep.subr.mxu0 0.0
    %1434 = vmatpush1.msra.mxu0 0.0
    %1435 = vmatprep.mubr.f32.mxu0 0.0
    %1436 = vmatmul.mubr.f32.gmra.mrb[0].mxu0 %v557
    %v1437 = vpop.f32.mrb[0].mxu0
    %v1438 = vadd.f32 %v1325, %v1437
    %v1439 = vpop.f32.mrb[0].mxu0
    %v1440 = vadd.f32 %v1327, %v1439
    %1441 = vmatprep.mubr.f32.mxu0 0.0
    %1442 = vmatmul.mubr.f32.gmra.mrb[0].mxu0 %v560
    %v1443 = vpop.f32.mrb[0].mxu0
    %v1444 = vadd.f32 %v1331, %v1443
    %v1445 = vpop.f32.mrb[0].mxu0
    %v1446 = vadd.f32 %v1333, %v1445
    %1447 = vmatprep.mubr.f32.mxu0 0.0
    %1448 = vmatmul.mubr.f32.gmra.mrb[0].mxu0 %v563
    %v1449 = vpop.f32.mrb[0].mxu0
    %v1450 = vadd.f32 %v1337, %v1449
    %v1451 = vpop.f32.mrb[0].mxu0
    %v1452 = vadd.f32 %v1339, %v1451
    %1453 = vmatprep.mubr.f32.mxu0 0.0
    %1454 = vmatmul.mubr.f32.gmra.mrb[0].mxu0 %v566
    %v1455 = vpop.f32.mrb[0].mxu0
    %v1456 = vadd.f32 %v1343, %v1455
    %v1457 = vpop.f32.mrb[0].mxu0
    %v1458 = vadd.f32 %v1345, %v1457
    %1459 = vmatprep.mubr.f32.mxu0 0.0
    %1460 = vmatmul.mubr.f32.gmra.mrb[0].mxu0 %v569
    %v1461 = vpop.f32.mrb[0].mxu0
    %v1462 = vadd.f32 %v1349, %v1461
    %v1463 = vpop.f32.mrb[0].mxu0
    %v1464 = vadd.f32 %v1351, %v1463
    %1465 = vmatprep.mubr.f32.mxu0 0.0
    %1466 = vmatmul.mubr.f32.gmra.mrb[0].mxu0 %v572
    %v1467 = vpop.f32.mrb[0].mxu0
    %v1468 = vadd.f32 %v1355, %v1467
    %v1469 = vpop.f32.mrb[0].mxu0
    %v1470 = vadd.f32 %v1357, %v1469
    %1471 = vmatprep.mubr.f32.mxu0 0.0
    %1472 = vmatmul.mubr.f32.gmra.mrb[0].mxu0 %v575
    %v1473 = vpop.f32.mrb[0].mxu0
    %v1474 = vadd.f32 %v1361, %v1473
    %v1475 = vpop.f32.mrb[0].mxu0
    %v1476 = vadd.f32 %v1363, %v1475
    %1477 = vmatprep.mubr.f32.mxu0 0.0
    %1478 = vmatmul.mubr.f32.gmra.mrb[0].mxu0 %v578
    %v1479 = vpop.f32.mrb[0].mxu0
    %v1480 = vadd.f32 %v1367, %v1479
    %v1481 = vpop.f32.mrb[0].mxu0
    %v1482 = vadd.f32 %v1369, %v1481
    %1483 = vdwg.mxu0
    %v1484 = vmax.f32 %v986, 0.0
    %v1485 = vmax.f32 %v988, 0.0
    %v1486 = vmax.f32 %v1438, 0.0
    %v1487 = vmax.f32 %v1440, 0.0
    %v1488 = vmax.f32 %v992, 0.0
    %v1489 = vmax.f32 %v994, 0.0
    %v1490 = vmax.f32 %v1444, 0.0
    %v1491 = vmax.f32 %v1446, 0.0
    %v1492 = vmax.f32 %v998, 0.0
    %v1493 = vmax.f32 %v1000, 0.0
    %v1494 = vmax.f32 %v1450, 0.0
    %v1495 = vmax.f32 %v1452, 0.0
    %v1496 = vmax.f32 %v1004, 0.0
    %v1497 = vmax.f32 %v1006, 0.0
    %v1498 = vmax.f32 %v1456, 0.0
    %v1499 = vmax.f32 %v1458, 0.0
    %v1500 = vmax.f32 %v1010, 0.0
    %v1501 = vmax.f32 %v1012, 0.0
    %v1502 = vmax.f32 %v1462, 0.0
    %v1503 = vmax.f32 %v1464, 0.0
    %v1504 = vmax.f32 %v1016, 0.0
    %v1505 = vmax.f32 %v1018, 0.0
    %v1506 = vmax.f32 %v1468, 0.0
    %v1507 = vmax.f32 %v1470, 0.0
    %v1508 = vmax.f32 %v1022, 0.0
    %v1509 = vmax.f32 %v1024, 0.0
    %v1510 = vmax.f32 %v1474, 0.0
    %v1511 = vmax.f32 %v1476, 0.0
    %v1512 = vmax.f32 %v1028, 0.0
    %v1513 = vmax.f32 %v1030, 0.0
    %v1514 = vmax.f32 %v1480, 0.0
    %v1515 = vmax.f32 %v1482, 0.0
    %v1516 = vld [vmem:[#allocation8] sm:$0xff]
    %v1517 = vld [vmem:[#allocation8 + $0x8] sm:$0xff]
    %v1518 = vld [vmem:[#allocation8 + $0x10] sm:$0xff]
    %v1519 = vld [vmem:[#allocation8 + $0x18] sm:$0xff]
    %v1520 = vld [vmem:[#allocation8 + $0x20] sm:$0xff]
    %v1521 = vld [vmem:[#allocation8 + $0x28] sm:$0xff]
    %v1522 = vld [vmem:[#allocation8 + $0x30] sm:$0xff]
    %v1523 = vld [vmem:[#allocation8 + $0x38] sm:$0xff]
    %v1524 = vld [vmem:[#allocation8 + $0x40] sm:$0xff]
    %v1525 = vld [vmem:[#allocation8 + $0x48] sm:$0xff]
    %v1526 = vld [vmem:[#allocation8 + $0x50] sm:$0xff]
    %v1527 = vld [vmem:[#allocation8 + $0x58] sm:$0xff]
    %v1528 = vld [vmem:[#allocation8 + $0x60] sm:$0xff]
    %v1529 = vld [vmem:[#allocation8 + $0x68] sm:$0xff]
    %v1530 = vld [vmem:[#allocation8 + $0x70] sm:$0xff]
    %v1531 = vld [vmem:[#allocation8 + $0x78] sm:$0xff]
    %v1532 = vld [vmem:[#allocation8 + $0x80] sm:$0xff]
    %v1533 = vld [vmem:[#allocation8 + $0x88] sm:$0xff]
    %v1534 = vld [vmem:[#allocation8 + $0x90] sm:$0xff]
    %v1535 = vld [vmem:[#allocation8 + $0x98] sm:$0xff]
    %v1536 = vld [vmem:[#allocation8 + $0xa0] sm:$0xff]
    %v1537 = vld [vmem:[#allocation8 + $0xa8] sm:$0xff]
    %v1538 = vld [vmem:[#allocation8 + $0xb0] sm:$0xff]
    %v1539 = vld [vmem:[#allocation8 + $0xb8] sm:$0xff]
    %v1540 = vld [vmem:[#allocation8 + $0xc0] sm:$0xff]
    %v1541 = vld [vmem:[#allocation8 + $0xc8] sm:$0xff]
    %v1542 = vld [vmem:[#allocation8 + $0xd0] sm:$0xff]
    %v1543 = vld [vmem:[#allocation8 + $0xd8] sm:$0xff]
    %v1544 = vld [vmem:[#allocation8 + $0xe0] sm:$0xff]
    %v1545 = vld [vmem:[#allocation8 + $0xe8] sm:$0xff]
    %v1546 = vld [vmem:[#allocation8 + $0xf0] sm:$0xff]
    %v1547 = vld [vmem:[#allocation8 + $0xf8] sm:$0xff]
    %v1548 = vld [vmem:[#allocation8 + $0x100] sm:$0xff]
    %v1549 = vld [vmem:[#allocation8 + $0x108] sm:$0xff]
    %v1550 = vld [vmem:[#allocation8 + $0x110] sm:$0xff]
    %v1551 = vld [vmem:[#allocation8 + $0x118] sm:$0xff]
    %v1552 = vld [vmem:[#allocation8 + $0x120] sm:$0xff]
    %v1553 = vld [vmem:[#allocation8 + $0x128] sm:$0xff]
    %v1554 = vld [vmem:[#allocation8 + $0x130] sm:$0xff]
    %v1555 = vld [vmem:[#allocation8 + $0x138] sm:$0xff]
    %v1556 = vld [vmem:[#allocation8 + $0x140] sm:$0xff]
    %v1557 = vld [vmem:[#allocation8 + $0x148] sm:$0xff]
    %v1558 = vld [vmem:[#allocation8 + $0x150] sm:$0xff]
    %v1559 = vld [vmem:[#allocation8 + $0x158] sm:$0xff]
    %v1560 = vld [vmem:[#allocation8 + $0x160] sm:$0xff]
    %v1561 = vld [vmem:[#allocation8 + $0x168] sm:$0xff]
    %v1562 = vld [vmem:[#allocation8 + $0x170] sm:$0xff]
    %v1563 = vld [vmem:[#allocation8 + $0x178] sm:$0xff]
    %v1564 = vld [vmem:[#allocation8 + $0x180] sm:$0xff]
    %v1565 = vld [vmem:[#allocation8 + $0x188] sm:$0xff]
    %v1566 = vld [vmem:[#allocation8 + $0x190] sm:$0xff]
    %v1567 = vld [vmem:[#allocation8 + $0x198] sm:$0xff]
    %v1568 = vld [vmem:[#allocation8 + $0x1a0] sm:$0xff]
    %v1569 = vld [vmem:[#allocation8 + $0x1a8] sm:$0xff]
    %v1570 = vld [vmem:[#allocation8 + $0x1b0] sm:$0xff]
    %v1571 = vld [vmem:[#allocation8 + $0x1b8] sm:$0xff]
    %v1572 = vld [vmem:[#allocation8 + $0x1c0] sm:$0xff]
    %v1573 = vld [vmem:[#allocation8 + $0x1c8] sm:$0xff]
    %v1574 = vld [vmem:[#allocation8 + $0x1d0] sm:$0xff]
    %v1575 = vld [vmem:[#allocation8 + $0x1d8] sm:$0xff]
    %v1576 = vld [vmem:[#allocation8 + $0x1e0] sm:$0xff]
    %v1577 = vld [vmem:[#allocation8 + $0x1e8] sm:$0xff]
    %v1578 = vld [vmem:[#allocation8 + $0x1f0] sm:$0xff]
    %v1579 = vld [vmem:[#allocation8 + $0x1f8] sm:$0xff]
    %v1580 = vld [vmem:[#allocation10] sm:$0x1]
    %v1582 = vlaneseq
    %v1583 = vshrl.u32 %v1582, 7
    %v1584 = vsub.s32 0, %v1583
    %v1585 = vrot.slane %v1580, %v1584
    %1587 = vmatprep.subr.mxu0 0.0
    %1588 = vmatpush1.msra.mxu0 %v1516
    %1589 = vmatprep.subr.mxu0 0.0
    %1590 = vmatpush1.msra.mxu0 %v1517
    %1591 = vmatprep.subr.mxu0 0.0
    %1592 = vmatpush1.msra.mxu0 %v1518
    %1593 = vmatprep.subr.mxu0 0.0
    %1594 = vmatpush1.msra.mxu0 %v1519
    %1595 = vmatprep.subr.mxu0 0.0
    %1596 = vmatpush1.msra.mxu0 %v1520
    %1597 = vmatprep.subr.mxu0 0.0
    %1598 = vmatpush1.msra.mxu0 %v1521
    %1599 = vmatprep.subr.mxu0 0.0
    %1600 = vmatpush1.msra.mxu0 %v1522
    %1601 = vmatprep.subr.mxu0 0.0
    %1602 = vmatpush1.msra.mxu0 %v1523
    %1603 = vmatprep.subr.mxu0 0.0
    %1604 = vmatpush1.msra.mxu0 %v1524
    %1605 = vmatprep.subr.mxu0 0.0
    %1606 = vmatpush1.msra.mxu0 %v1525
    %1607 = vmatprep.subr.mxu0 0.0
    %1608 = vmatpush1.msra.mxu0 %v1526
    %1609 = vmatprep.subr.mxu0 0.0
    %1610 = vmatpush1.msra.mxu0 %v1527
    %1611 = vmatprep.subr.mxu0 0.0
    %1612 = vmatpush1.msra.mxu0 %v1528
    %1613 = vmatprep.subr.mxu0 0.0
    %1614 = vmatpush1.msra.mxu0 %v1529
    %1615 = vmatprep.subr.mxu0 0.0
    %1616 = vmatpush1.msra.mxu0 %v1530
    %1617 = vmatprep.subr.mxu0 0.0
    %1618 = vmatpush1.msra.mxu0 %v1531
    %1619 = vmatprep.subr.mxu0 0.0
    %1620 = vmatpush1.msra.mxu0 %v1532
    %1621 = vmatprep.subr.mxu0 0.0
    %1622 = vmatpush1.msra.mxu0 %v1533
    %1623 = vmatprep.subr.mxu0 0.0
    %1624 = vmatpush1.msra.mxu0 %v1534
    %1625 = vmatprep.subr.mxu0 0.0
    %1626 = vmatpush1.msra.mxu0 %v1535
    %1627 = vmatprep.subr.mxu0 0.0
    %1628 = vmatpush1.msra.mxu0 %v1536
    %1629 = vmatprep.subr.mxu0 0.0
    %1630 = vmatpush1.msra.mxu0 %v1537
    %1631 = vmatprep.subr.mxu0 0.0
    %1632 = vmatpush1.msra.mxu0 %v1538
    %1633 = vmatprep.subr.mxu0 0.0
    %1634 = vmatpush1.msra.mxu0 %v1539
    %1635 = vmatprep.subr.mxu0 0.0
    %1636 = vmatpush1.msra.mxu0 %v1540
    %1637 = vmatprep.subr.mxu0 0.0
    %1638 = vmatpush1.msra.mxu0 %v1541
    %1639 = vmatprep.subr.mxu0 0.0
    %1640 = vmatpush1.msra.mxu0 %v1542
    %1641 = vmatprep.subr.mxu0 0.0
    %1642 = vmatpush1.msra.mxu0 %v1543
    %1643 = vmatprep.subr.mxu0 0.0
    %1644 = vmatpush1.msra.mxu0 %v1544
    %1645 = vmatprep.subr.mxu0 0.0
    %1646 = vmatpush1.msra.mxu0 %v1545
    %1647 = vmatprep.subr.mxu0 0.0
    %1648 = vmatpush1.msra.mxu0 %v1546
    %1649 = vmatprep.subr.mxu0 0.0
    %1650 = vmatpush1.msra.mxu0 %v1547
    %1651 = vmatprep.mubr.f32.mxu0 %v1485
    %1652 = vmatmul.mubr.f32.gmra.mrb[0].mxu0 %v1484
    %v1653 = vpop.f32.mrb[0].mxu0
    %v1654 = vadd.f32 %v1585, %v1653
    %v1655 = vpop.f32.mrb[0].mxu0
    %1656 = vmatprep.mubr.f32.mxu0 %v1489
    %1657 = vmatmul.mubr.f32.gmra.mrb[0].mxu0 %v1488
    %v1658 = vpop.f32.mrb[0].mxu0
    %v1659 = vadd.f32 %v1585, %v1658
    %v1660 = vpop.f32.mrb[0].mxu0
    %1661 = vmatprep.mubr.f32.mxu0 %v1493
    %1662 = vmatmul.mubr.f32.gmra.mrb[0].mxu0 %v1492
    %v1663 = vpop.f32.mrb[0].mxu0
    %v1664 = vadd.f32 %v1585, %v1663
    %v1665 = vpop.f32.mrb[0].mxu0
    %1666 = vmatprep.mubr.f32.mxu0 %v1497
    %1667 = vmatmul.mubr.f32.gmra.mrb[0].mxu0 %v1496
    %v1668 = vpop.f32.mrb[0].mxu0
    %v1669 = vadd.f32 %v1585, %v1668
    %v1670 = vpop.f32.mrb[0].mxu0
    %1671 = vmatprep.mubr.f32.mxu0 %v1501
    %1672 = vmatmul.mubr.f32.gmra.mrb[0].mxu0 %v1500
    %v1673 = vpop.f32.mrb[0].mxu0
    %v1674 = vadd.f32 %v1585, %v1673
    %v1675 = vpop.f32.mrb[0].mxu0
    %1676 = vmatprep.mubr.f32.mxu0 %v1505
    %1677 = vmatmul.mubr.f32.gmra.mrb[0].mxu0 %v1504
    %v1678 = vpop.f32.mrb[0].mxu0
    %v1679 = vadd.f32 %v1585, %v1678
    %v1680 = vpop.f32.mrb[0].mxu0
    %1681 = vmatprep.mubr.f32.mxu0 %v1509
    %1682 = vmatmul.mubr.f32.gmra.mrb[0].mxu0 %v1508
    %v1683 = vpop.f32.mrb[0].mxu0
    %v1684 = vadd.f32 %v1585, %v1683
    %v1685 = vpop.f32.mrb[0].mxu0
    %1686 = vmatprep.mubr.f32.mxu0 %v1513
    %1687 = vmatmul.mubr.f32.gmra.mrb[0].mxu0 %v1512
    %v1688 = vpop.f32.mrb[0].mxu0
    %v1689 = vadd.f32 %v1585, %v1688
    %v1690 = vpop.f32.mrb[0].mxu0
    %1691 = vdwg.mxu0
    %1692 = vmatprep.subr.mxu0 0.0
    %1693 = vmatpush1.msra.mxu0 %v1548
    %1694 = vmatprep.subr.mxu0 0.0
    %1695 = vmatpush1.msra.mxu0 %v1549
    %1696 = vmatprep.subr.mxu0 0.0
    %1697 = vmatpush1.msra.mxu0 %v1550
    %1698 = vmatprep.subr.mxu0 0.0
    %1699 = vmatpush1.msra.mxu0 %v1551
    %1700 = vmatprep.subr.mxu0 0.0
    %1701 = vmatpush1.msra.mxu0 %v1552
    %1702 = vmatprep.subr.mxu0 0.0
    %1703 = vmatpush1.msra.mxu0 %v1553
    %1704 = vmatprep.subr.mxu0 0.0
    %1705 = vmatpush1.msra.mxu0 %v1554
    %1706 = vmatprep.subr.mxu0 0.0
    %1707 = vmatpush1.msra.mxu0 %v1555
    %1708 = vmatprep.subr.mxu0 0.0
    %1709 = vmatpush1.msra.mxu0 %v1556
    %1710 = vmatprep.subr.mxu0 0.0
    %1711 = vmatpush1.msra.mxu0 %v1557
    %1712 = vmatprep.subr.mxu0 0.0
    %1713 = vmatpush1.msra.mxu0 %v1558
    %1714 = vmatprep.subr.mxu0 0.0
    %1715 = vmatpush1.msra.mxu0 %v1559
    %1716 = vmatprep.subr.mxu0 0.0
    %1717 = vmatpush1.msra.mxu0 %v1560
    %1718 = vmatprep.subr.mxu0 0.0
    %1719 = vmatpush1.msra.mxu0 %v1561
    %1720 = vmatprep.subr.mxu0 0.0
    %1721 = vmatpush1.msra.mxu0 %v1562
    %1722 = vmatprep.subr.mxu0 0.0
    %1723 = vmatpush1.msra.mxu0 %v1563
    %1724 = vmatprep.subr.mxu0 0.0
    %1725 = vmatpush1.msra.mxu0 %v1564
    %1726 = vmatprep.subr.mxu0 0.0
    %1727 = vmatpush1.msra.mxu0 %v1565
    %1728 = vmatprep.subr.mxu0 0.0
    %1729 = vmatpush1.msra.mxu0 %v1566
    %1730 = vmatprep.subr.mxu0 0.0
    %1731 = vmatpush1.msra.mxu0 %v1567
    %1732 = vmatprep.subr.mxu0 0.0
    %1733 = vmatpush1.msra.mxu0 %v1568
    %1734 = vmatprep.subr.mxu0 0.0
    %1735 = vmatpush1.msra.mxu0 %v1569
    %1736 = vmatprep.subr.mxu0 0.0
    %1737 = vmatpush1.msra.mxu0 %v1570
    %1738 = vmatprep.subr.mxu0 0.0
    %1739 = vmatpush1.msra.mxu0 %v1571
    %1740 = vmatprep.subr.mxu0 0.0
    %1741 = vmatpush1.msra.mxu0 %v1572
    %1742 = vmatprep.subr.mxu0 0.0
    %1743 = vmatpush1.msra.mxu0 %v1573
    %1744 = vmatprep.subr.mxu0 0.0
    %1745 = vmatpush1.msra.mxu0 %v1574
    %1746 = vmatprep.subr.mxu0 0.0
    %1747 = vmatpush1.msra.mxu0 %v1575
    %1748 = vmatprep.subr.mxu0 0.0
    %1749 = vmatpush1.msra.mxu0 %v1576
    %1750 = vmatprep.subr.mxu0 0.0
    %1751 = vmatpush1.msra.mxu0 %v1577
    %1752 = vmatprep.subr.mxu0 0.0
    %1753 = vmatpush1.msra.mxu0 %v1578
    %1754 = vmatprep.subr.mxu0 0.0
    %1755 = vmatpush1.msra.mxu0 %v1579
    %1756 = vmatprep.mubr.f32.mxu0 %v1487
    %1757 = vmatmul.mubr.f32.gmra.mrb[0].mxu0 %v1486
    %v1758 = vpop.f32.mrb[0].mxu0
    %v1759 = vadd.f32 %v1654, %v1758
    %v1760 = vpop.f32.mrb[0].mxu0
    %1761 = vmatprep.mubr.f32.mxu0 %v1491
    %1762 = vmatmul.mubr.f32.gmra.mrb[0].mxu0 %v1490
    %v1763 = vpop.f32.mrb[0].mxu0
    %v1764 = vadd.f32 %v1659, %v1763
    %v1765 = vpop.f32.mrb[0].mxu0
    %1766 = vmatprep.mubr.f32.mxu0 %v1495
    %1767 = vmatmul.mubr.f32.gmra.mrb[0].mxu0 %v1494
    %v1768 = vpop.f32.mrb[0].mxu0
    %v1769 = vadd.f32 %v1664, %v1768
    %v1770 = vpop.f32.mrb[0].mxu0
    %1771 = vmatprep.mubr.f32.mxu0 %v1499
    %1772 = vmatmul.mubr.f32.gmra.mrb[0].mxu0 %v1498
    %v1773 = vpop.f32.mrb[0].mxu0
    %v1774 = vadd.f32 %v1669, %v1773
    %v1775 = vpop.f32.mrb[0].mxu0
    %1776 = vmatprep.mubr.f32.mxu0 %v1503
    %1777 = vmatmul.mubr.f32.gmra.mrb[0].mxu0 %v1502
    %v1778 = vpop.f32.mrb[0].mxu0
    %v1779 = vadd.f32 %v1674, %v1778
    %v1780 = vpop.f32.mrb[0].mxu0
    %1781 = vmatprep.mubr.f32.mxu0 %v1507
    %1782 = vmatmul.mubr.f32.gmra.mrb[0].mxu0 %v1506
    %v1783 = vpop.f32.mrb[0].mxu0
    %v1784 = vadd.f32 %v1679, %v1783
    %v1785 = vpop.f32.mrb[0].mxu0
    %1786 = vmatprep.mubr.f32.mxu0 %v1511
    %1787 = vmatmul.mubr.f32.gmra.mrb[0].mxu0 %v1510
    %v1788 = vpop.f32.mrb[0].mxu0
    %v1789 = vadd.f32 %v1684, %v1788
    %v1790 = vpop.f32.mrb[0].mxu0
    %1791 = vmatprep.mubr.f32.mxu0 %v1515
    %1792 = vmatmul.mubr.f32.gmra.mrb[0].mxu0 %v1514
    %v1793 = vpop.f32.mrb[0].mxu0
    %v1794 = vadd.f32 %v1689, %v1793
    %v1795 = vpop.f32.mrb[0].mxu0
    %1796 = vdwg.mxu0
    %1797 = vst [vmem:[#allocation11] sm:$0xff] %v1759
    %1798 = vst [vmem:[#allocation11 + $0x8] sm:$0xff] %v1764
    %1799 = vst [vmem:[#allocation11 + $0x10] sm:$0xff] %v1769
    %1800 = vst [vmem:[#allocation11 + $0x18] sm:$0xff] %v1774
    %1801 = vst [vmem:[#allocation11 + $0x20] sm:$0xff] %v1779
    %1802 = vst [vmem:[#allocation11 + $0x28] sm:$0xff] %v1784
    %1803 = vst [vmem:[#allocation11 + $0x30] sm:$0xff] %v1789
    %1804 = vst [vmem:[#allocation11 + $0x38] sm:$0xff] %v1794
    // Predicated region
    $region42: #{tpu_custom_call.1} parent=1 // pred_check
      _
    $region43: #{tpu_custom_call.1} parent=1 // pred_check_branch
      %1806 = sbr.rel (0) target = $region45
    $region44: #{tpu_custom_call.1} parent=1 // pred_region
      %s1808 = ssub.s32 1024, 1024
      %1809 = vsyncadd [#allocation4], %s1808
      %s1810 = sshll.u32 [#allocation11], 4
      %s1811 = int_to_ptr.vmem [resolvable:$true] %s1810
      %1816 = dma.vmem_to_hbm [thread:$0]  %s1811, 1024, %s5, [#allocation4], 128, 128, 8
    $region45: #{tpu_custom_call.1} parent=1 // pred_fallthru
      _
    // Predicated region
    $region46: #{tpu_custom_call.1} parent=1 // pred_check
      _
    $region47: #{tpu_custom_call.1} parent=1 // pred_check_branch
      %1818 = sbr.rel (0) target = $region49
    $region48: #{tpu_custom_call.1} parent=1 // pred_region
      %1819 = dma.done [#allocation4], 1024
    $region49: #{tpu_custom_call.1} parent=1 // pred_fallthru
      _
    %1820 = vsyncpa [#allocation3], 1
    %1821 = vsyncpa [#allocation6], 1
    %1822 = vsyncpa [#allocation9], 1
    %1823 = vsyncpa [#allocation4], 1

</llo_original>
